<compile_context>
chip_gen: v6e
topology: v6e:2x2x1
jax: 0.10.0
libtpu: 0.0.40
codegen_flags: <defaults>
</compile_context>

<pallas_src>
import functools
import random

import jax
import jax.numpy as jnp
from jax.experimental import pallas as pl
from jax.experimental.pallas import tpu as pltpu

# Small, deterministic problem sizes consistent with the module's forward().
B, C, H, W = 2, 4, 16, 16      # batch, feature_size (= channels), spatial
COUT = 8                       # encoder conv output channels
HID = 32                       # decoder LSTM hidden size
T = 8                          # target_length
KH = KW = 3                    # conv kernel


def _vmem():
    return pl.BlockSpec(memory_space=pltpu.MemorySpace.VMEM)


# ------------------------------ fused kernel ------------------------------ #
def fused_kernel(patches_ref, cw_ref, cb_ref, efw_ref, efb_ref,
                 tgt_ref, wih_ref, whh_ref, b_ref, whhf_ref, bf_ref,
                 dfw_ref, dfb_ref, out_ref, *, tf_flags, batch, hid, hw):
    """Encoder prologue + full T-step LSTM decoder recurrence, one kernel.

    patches_ref: (9*C, B*H*W)   im2col'd conv input (lane-dense, 512 lanes)
    cw_ref     : (COUT, 9*C)    conv weight flattened to match patches
    cb_ref     : (COUT, 1)      conv bias
    efw_ref    : (COUT, C)      encoder fc weight (pre-transposed)
    efb_ref    : (1, C)         encoder fc bias
    tgt_ref    : (T*B, C)       teacher-forcing targets, flattened
    wih_ref    : (C, 4*HID)     LSTM W_ih (pre-transposed, i/f/o cols prescaled x0.5)
    whh_ref    : (HID, 4*HID)   LSTM W_hh (pre-transposed, prescaled)
    b_ref      : (1, 4*HID)     b_ih + b_hh (prescaled)
    whhf_ref   : (HID, 4*HID)   Whh + dfw@Wih  (decoder-FC fold, prescaled)
    bf_ref     : (1, 4*HID)     b + dfb@Wih    (decoder-FC fold, prescaled)
    dfw_ref    : (HID, C)       decoder fc weight (pre-transposed)
    dfb_ref    : (1, C)         decoder fc bias
    out_ref    : (T*B, C)       outputs (reshaped to (T, B, C) by the wrapper)
    """
    f32 = jnp.float32
    n_steps = len(tf_flags)

    # ---- encoder: 3x3 conv as one 2-D matmul + bias + ReLU + global-avg-pool + fc ----
    conv = jnp.dot(cw_ref[...], patches_ref[...],
                   preferred_element_type=f32)                      # (COUT, B*HW)
    conv = jnp.maximum(conv + cb_ref[...], 0.0)                     # bias + ReLU
    cout = conv.shape[0]
    pooled = jnp.mean(conv.reshape(cout, batch, hw), axis=-1).T     # (B, COUT)
    x0 = (jnp.dot(pooled, efw_ref[...], preferred_element_type=f32)
          + efb_ref[...])                                           # (B, C)

    # ---- decoder: T-step LSTM recurrence, 1 MXU push + 1 full-width tanh per step ----
    wih = wih_ref[...]
    whh = whh_ref[...]
    bias = b_ref[...]
    whh_f = whhf_ref[...]
    bias_f = bf_ref[...]
    dfw = dfw_ref[...]
    dfb = dfb_ref[...]

    # One tanh handles all four gates: i/f/o pre-activations arrive prescaled by 0.5,
    # and sigmoid(z) == 0.5*tanh(z/2) + 0.5, so act = tanh(gates)*alpha + beta.
    lane = jax.lax.broadcasted_iota(jnp.int32, (batch, 4 * hid), 1)
    g_lanes = (lane >= 2 * hid) & (lane < 3 * hid)
    alpha = jnp.where(g_lanes, 1.0, 0.5).astype(f32)
    beta = jnp.where(g_lanes, 0.0, 0.5).astype(f32)

    # Teacher-forced inputs: project ALL targets through W_ih in one matmul (off the
    # serial chain); only needed if any TF flag before the final step is set.
    need_tf = any(bool(fl) for fl in tf_flags[:n_steps - 1])
    if need_tf:
        tgt_proj = jnp.dot(tgt_ref[...], wih, preferred_element_type=f32)  # (T*B, 4*HID)

    h = jnp.zeros((batch, hid), f32)
    c = jnp.zeros((batch, hid), f32)
    # TODO(synk): hidden state carried across timesteps (reference state handling unknown).
    hs = []
    for t in range(n_steps):                    # static unroll: T is small & known
        if t == 0:
            gates = jnp.dot(x0, wih, preferred_element_type=f32) + bias
        elif tf_flags[t - 1]:
            gates = (tgt_proj[(t - 1) * batch:t * batch, :]
                     + jnp.dot(h, whh, preferred_element_type=f32) + bias)
        else:
            # input was the previous decoder output -> decoder FC folded into W_hh/bias
            gates = jnp.dot(h, whh_f, preferred_element_type=f32) + bias_f
        act = jnp.tanh(gates) * alpha + beta                        # (B, 4*HID)
        i = act[:, 0 * hid:1 * hid]
        f = act[:, 1 * hid:2 * hid]
        g = act[:, 2 * hid:3 * hid]
        o = act[:, 3 * hid:4 * hid]
        c = f * c + i * g
        h = o * jnp.tanh(c)
        hs.append(h)

    # All T decoder-FC outputs in one matmul + one store.
    hs_all = jnp.concatenate(hs, axis=0)                            # (T*B, HID)
    ys = jnp.dot(hs_all, dfw, preferred_element_type=f32) + dfb     # (T*B, C)
    out_ref[...] = ys.astype(out_ref.dtype)


# ----------------------------- param preparation --------------------------- #
def prepare_params(params):
    """One-time weight layout prep (transposes, gate prescale, decoder-FC fold)."""
    cw, cb, efw, efb = params["encoder"]
    wih, whh, b, dfw, dfb = params["decoder"]
    cout, ch = cw.shape[0], cw.shape[1]
    hid = whh.shape[1]

    # sigmoid(z) = 0.5*tanh(z/2) + 0.5  ->  prescale i/f/o gate columns by 0.5.
    scale = jnp.concatenate([jnp.full((2 * hid,), 0.5, jnp.float32),   # i, f
                             jnp.ones((hid,), jnp.float32),            # g
                             jnp.full((hid,), 0.5, jnp.float32)])[None, :]  # o  -> (1, 4H)
    wih_s = wih.T * scale                                   # (C, 4H)
    whh_s = whh.T * scale                                   # (HID, 4H)
    b_s = b * scale                                         # (1, 4H)
    dfw_t = dfw.T                                           # (HID, C)
    whh_f = whh_s + dfw_t @ wih_s                           # fold decoder FC into W_hh
    b_f = b_s + dfb @ wih_s                                 # fold decoder FC bias
    return {
        "cw2": cw.reshape(cout, ch * KH * KW),
        "cb2": cb.reshape(cout, 1),
        "efw_t": efw.T,
        "efb": efb,
        "wih_s": wih_s,
        "whh_s": whh_s,
        "b_s": b_s,
        "whh_f": whh_f,
        "b_f": b_f,
        "dfw_t": dfw_t,
        "dfb": dfb,
    }


# -------------------------------- wrapper ---------------------------------- #
@functools.partial(jax.jit, static_argnames=("tf_flags", "target_length"))
def _fused_forward(prep, input_seq, target, tf_flags, target_length):
    bsz, ch, hh, ww = input_seq.shape
    hid = prep["whh_s"].shape[0]

    # im2col in the XLA wrapper: (9*C, B*H*W) lane-dense patches matching cw.reshape order.
    xp = jnp.pad(input_seq, ((0, 0), (0, 0), (1, 1), (1, 1)))       # padding=1
    pats = jnp.stack([xp[:, :, kh:kh + hh, kw:kw + ww]
                      for kh in range(KH) for kw in range(KW)], axis=2)   # (B, C, 9, H, W)
    patches = pats.transpose(1, 2, 0, 3, 4).reshape(ch * KH * KW, bsz * hh * ww)
    tgt_flat = target.reshape(target_length * bsz, ch)

    kernel = functools.partial(fused_kernel, tf_flags=tf_flags,
                               batch=bsz, hid=hid, hw=hh * ww)
    out_flat = pl.pallas_call(
        kernel,
        out_shape=jax.ShapeDtypeStruct((target_length * bsz, ch), jnp.float32),
        in_specs=[_vmem()] * 13,
        out_specs=_vmem(),
    )(patches, prep["cw2"], prep["cb2"], prep["efw_t"], prep["efb"],
      tgt_flat, prep["wih_s"], prep["whh_s"], prep["b_s"],
      prep["whh_f"], prep["b_f"], prep["dfw_t"], prep["dfb"])
    return out_flat.reshape(target_length, bsz, ch)


def cnn_lstm_forward(prep, input_seq, target, target_length,
                     teach_forcing_rate=0.5, seed=0):
    """Mirrors CnnLstm.forward: returns (target_length, B, feature_size)."""
    # Teacher-forcing draws depend only on the seed (one draw per timestep, in order),
    # so precompute them host-side — same draw order as the reference loop. Static
    # flags let each unrolled decoder step be specialized at trace time.
    rng = random.Random(seed)
    tf_flags = tuple(int(rng.random() < teach_forcing_rate)
                     for _ in range(target_length))
    return _fused_forward(prep, input_seq, target, tf_flags, target_length)


def init_params(key):
    ks = jax.random.split(key, 8)
    s = 0.1
    encoder = (
        s * jax.random.normal(ks[0], (COUT, C, KH, KW), jnp.float32),   # conv weight
        s * jax.random.normal(ks[1], (1, COUT), jnp.float32),           # conv bias
        s * jax.random.normal(ks[2], (C, COUT), jnp.float32),           # enc fc weight
        s * jax.random.normal(ks[3], (1, C), jnp.float32),              # enc fc bias
    )
    decoder = (
        s * jax.random.normal(ks[4], (4 * HID, C), jnp.float32),        # W_ih
        s * jax.random.normal(ks[5], (4 * HID, HID), jnp.float32),      # W_hh
        s * jax.random.normal(ks[6], (1, 4 * HID), jnp.float32),        # b_ih + b_hh
        s * jax.random.normal(ks[7], (C, HID), jnp.float32),            # dec fc weight
        jnp.zeros((1, C), jnp.float32),                                 # dec fc bias
    )
    return {"encoder": encoder, "decoder": decoder}


if __name__ == "__main__":
    key = jax.random.PRNGKey(0)
    k_in, k_tgt, k_par = jax.random.split(key, 3)
    input_seq = jax.random.normal(k_in, (B, C, H, W), jnp.float32)      # NCHW
    target = jax.random.normal(k_tgt, (T, B, C), jnp.float32)
    params = init_params(k_par)
    prep = prepare_params(params)                                       # one-time layout prep

    outputs = cnn_lstm_forward(prep, input_seq, target, target_length=T,
                               teach_forcing_rate=0.5, seed=0)
    outputs = jax.block_until_ready(outputs)
    assert outputs.shape == (T, B, C), outputs.shape
    assert bool(jnp.all(jnp.isfinite(outputs)))
    print("KERNEL_OK")
</pallas_src>

<mosaic_0001>
module attributes {stable_mosaic.version = 11 : i64} {
  func.func @fused_kernel(%arg0: memref<36x512xf32, #tpu.memory_space<vmem>>, %arg1: memref<8x36xf32, #tpu.memory_space<vmem>>, %arg2: memref<8x1xf32, #tpu.memory_space<vmem>>, %arg3: memref<8x4xf32, #tpu.memory_space<vmem>>, %arg4: memref<1x4xf32, #tpu.memory_space<vmem>>, %arg5: memref<16x4xf32, #tpu.memory_space<vmem>>, %arg6: memref<4x128xf32, #tpu.memory_space<vmem>>, %arg7: memref<32x128xf32, #tpu.memory_space<vmem>>, %arg8: memref<1x128xf32, #tpu.memory_space<vmem>>, %arg9: memref<32x128xf32, #tpu.memory_space<vmem>>, %arg10: memref<1x128xf32, #tpu.memory_space<vmem>>, %arg11: memref<32x4xf32, #tpu.memory_space<vmem>>, %arg12: memref<1x4xf32, #tpu.memory_space<vmem>>, %arg13: memref<16x4xf32, #tpu.memory_space<vmem>>) attributes {dimension_semantics = [], scalar_prefetch = 0 : i64, scratch_operands = 0 : i64, tpu.core_type = #tpu.core_type<tc>} {
    %c0 = arith.constant 0 : index
    %c0_0 = arith.constant 0 : index
    %0 = vector.load %arg1[%c0, %c0_0] : memref<8x36xf32, #tpu.memory_space<vmem>>, vector<8x36xf32>
    %c0_1 = arith.constant 0 : index
    %c0_2 = arith.constant 0 : index
    %1 = vector.load %arg0[%c0_1, %c0_2] : memref<36x512xf32, #tpu.memory_space<vmem>>, vector<36x512xf32>
    %cst = arith.constant dense<0.000000e+00> : vector<8x512xf32>
    %2 = tpu.matmul %0, %1, %cst {dimension_numbers = #tpu.dot_dimension_numbers<[1], [0], [0], [1], [0, 0, 1, 1], [], []>} : vector<8x36xf32>, vector<36x512xf32>, vector<8x512xf32> -> vector<8x512xf32>
    %c0_3 = arith.constant 0 : index
    %c0_4 = arith.constant 0 : index
    %3 = vector.load %arg2[%c0_3, %c0_4] : memref<8x1xf32, #tpu.memory_space<vmem>>, vector<8x1xf32>
    %4 = vector.broadcast %3 : vector<8x1xf32> to vector<8x512xf32>
    %5 = arith.addf %2, %4 : vector<8x512xf32>
    %cst_5 = arith.constant 0.000000e+00 : f32
    %6 = vector.broadcast %cst_5 : f32 to vector<8x512xf32>
    %7 = arith.maximumf %5, %6 : vector<8x512xf32>
    %8 = vector.shape_cast %7 : vector<8x512xf32> to vector<8x2x256xf32>
    %cst_6 = arith.constant dense<0.000000e+00> : vector<8x2xf32>
    %9 = vector.multi_reduction <add>, %8, %cst_6 [2] : vector<8x2x256xf32> to vector<8x2xf32>
    %cst_7 = arith.constant 2.560000e+02 : f32
    %10 = vector.broadcast %cst_7 : f32 to vector<8x2xf32>
    %11 = arith.divf %9, %10 : vector<8x2xf32>
    %12 = tpu.transpose %11, [1, 0] : vector<8x2xf32> -> vector<2x8xf32>
    %c0_8 = arith.constant 0 : index
    %c0_9 = arith.constant 0 : index
    %13 = vector.load %arg3[%c0_8, %c0_9] : memref<8x4xf32, #tpu.memory_space<vmem>>, vector<8x4xf32>
    %cst_10 = arith.constant dense<0.000000e+00> : vector<2x4xf32>
    %14 = tpu.matmul %12, %13, %cst_10 {dimension_numbers = #tpu.dot_dimension_numbers<[1], [0], [0], [1], [0, 0, 1, 1], [], []>} : vector<2x8xf32>, vector<8x4xf32>, vector<2x4xf32> -> vector<2x4xf32>
    %c0_11 = arith.constant 0 : index
    %c0_12 = arith.constant 0 : index
    %15 = vector.load %arg4[%c0_11, %c0_12] : memref<1x4xf32, #tpu.memory_space<vmem>>, vector<1x4xf32>
    %16 = vector.broadcast %15 : vector<1x4xf32> to vector<2x4xf32>
    %17 = arith.addf %14, %16 : vector<2x4xf32>
    %c0_13 = arith.constant 0 : index
    %c0_14 = arith.constant 0 : index
    %18 = vector.load %arg6[%c0_13, %c0_14] : memref<4x128xf32, #tpu.memory_space<vmem>>, vector<4x128xf32>
    %c0_15 = arith.constant 0 : index
    %c0_16 = arith.constant 0 : index
    %19 = vector.load %arg7[%c0_15, %c0_16] : memref<32x128xf32, #tpu.memory_space<vmem>>, vector<32x128xf32>
    %c0_17 = arith.constant 0 : index
    %c0_18 = arith.constant 0 : index
    %20 = vector.load %arg8[%c0_17, %c0_18] : memref<1x128xf32, #tpu.memory_space<vmem>>, vector<1x128xf32>
    %c0_19 = arith.constant 0 : index
    %c0_20 = arith.constant 0 : index
    %21 = vector.load %arg9[%c0_19, %c0_20] : memref<32x128xf32, #tpu.memory_space<vmem>>, vector<32x128xf32>
    %c0_21 = arith.constant 0 : index
    %c0_22 = arith.constant 0 : index
    %22 = vector.load %arg10[%c0_21, %c0_22] : memref<1x128xf32, #tpu.memory_space<vmem>>, vector<1x128xf32>
    %c0_23 = arith.constant 0 : index
    %c0_24 = arith.constant 0 : index
    %23 = vector.load %arg11[%c0_23, %c0_24] : memref<32x4xf32, #tpu.memory_space<vmem>>, vector<32x4xf32>
    %c0_25 = arith.constant 0 : index
    %c0_26 = arith.constant 0 : index
    %24 = vector.load %arg12[%c0_25, %c0_26] : memref<1x4xf32, #tpu.memory_space<vmem>>, vector<1x4xf32>
    %25 = tpu.iota {dimensions = array<i32: 1>} : vector<2x128xi32>
    %c64_i32 = arith.constant 64 : i32
    %26 = vector.broadcast %c64_i32 : i32 to vector<2x128xi32>
    %27 = arith.cmpi sge, %25, %26 : vector<2x128xi32>
    %c96_i32 = arith.constant 96 : i32
    %28 = vector.broadcast %c96_i32 : i32 to vector<2x128xi32>
    %29 = arith.cmpi slt, %25, %28 : vector<2x128xi32>
    %30 = arith.andi %27, %29 : vector<2x128xi1>
    %cst_27 = arith.constant 1.000000e+00 : f32
    %cst_28 = arith.constant 5.000000e-01 : f32
    %31 = vector.broadcast %cst_27 : f32 to vector<2x128xf32>
    %32 = vector.broadcast %cst_28 : f32 to vector<2x128xf32>
    %33 = arith.select %30, %31, %32 : vector<2x128xi1>, vector<2x128xf32>
    %cst_29 = arith.constant 0.000000e+00 : f32
    %cst_30 = arith.constant 5.000000e-01 : f32
    %34 = vector.broadcast %cst_29 : f32 to vector<2x128xf32>
    %35 = vector.broadcast %cst_30 : f32 to vector<2x128xf32>
    %36 = arith.select %30, %34, %35 : vector<2x128xi1>, vector<2x128xf32>
    %c0_31 = arith.constant 0 : index
    %c0_32 = arith.constant 0 : index
    %37 = vector.load %arg5[%c0_31, %c0_32] : memref<16x4xf32, #tpu.memory_space<vmem>>, vector<16x4xf32>
    %cst_33 = arith.constant dense<0.000000e+00> : vector<16x128xf32>
    %38 = tpu.matmul %37, %18, %cst_33 {dimension_numbers = #tpu.dot_dimension_numbers<[1], [0], [0], [1], [0, 0, 1, 1], [], []>} : vector<16x4xf32>, vector<4x128xf32>, vector<16x128xf32> -> vector<16x128xf32>
    %cst_34 = arith.constant 0.000000e+00 : f32
    %39 = vector.broadcast %cst_34 : f32 to vector<2x32xf32>
    %cst_35 = arith.constant dense<0.000000e+00> : vector<2x128xf32>
    %40 = tpu.matmul %17, %18, %cst_35 {dimension_numbers = #tpu.dot_dimension_numbers<[1], [0], [0], [1], [0, 0, 1, 1], [], []>} : vector<2x4xf32>, vector<4x128xf32>, vector<2x128xf32> -> vector<2x128xf32>
    %41 = vector.broadcast %20 : vector<1x128xf32> to vector<2x128xf32>
    %42 = arith.addf %40, %41 : vector<2x128xf32>
    %43 = math.tanh %42 : vector<2x128xf32>
    %44 = arith.mulf %43, %33 : vector<2x128xf32>
    %45 = arith.addf %44, %36 : vector<2x128xf32>
    %46 = vector.extract_strided_slice %45 {offsets = [0, 0], sizes = [2, 32], strides = [1, 1]} : vector<2x128xf32> to vector<2x32xf32>
    %47 = vector.extract_strided_slice %45 {offsets = [0, 32], sizes = [2, 32], strides = [1, 1]} : vector<2x128xf32> to vector<2x32xf32>
    %48 = vector.extract_strided_slice %45 {offsets = [0, 64], sizes = [2, 32], strides = [1, 1]} : vector<2x128xf32> to vector<2x32xf32>
    %49 = vector.extract_strided_slice %45 {offsets = [0, 96], sizes = [2, 32], strides = [1, 1]} : vector<2x128xf32> to vector<2x32xf32>
    %50 = arith.mulf %47, %39 : vector<2x32xf32>
    %51 = arith.mulf %46, %48 : vector<2x32xf32>
    %52 = arith.addf %50, %51 : vector<2x32xf32>
    %53 = math.tanh %52 : vector<2x32xf32>
    %54 = arith.mulf %49, %53 : vector<2x32xf32>
    %cst_36 = arith.constant dense<0.000000e+00> : vector<2x128xf32>
    %55 = tpu.matmul %54, %21, %cst_36 {dimension_numbers = #tpu.dot_dimension_numbers<[1], [0], [0], [1], [0, 0, 1, 1], [], []>} : vector<2x32xf32>, vector<32x128xf32>, vector<2x128xf32> -> vector<2x128xf32>
    %56 = vector.broadcast %22 : vector<1x128xf32> to vector<2x128xf32>
    %57 = arith.addf %55, %56 : vector<2x128xf32>
    %58 = math.tanh %57 : vector<2x128xf32>
    %59 = arith.mulf %58, %33 : vector<2x128xf32>
    %60 = arith.addf %59, %36 : vector<2x128xf32>
    %61 = vector.extract_strided_slice %60 {offsets = [0, 0], sizes = [2, 32], strides = [1, 1]} : vector<2x128xf32> to vector<2x32xf32>
    %62 = vector.extract_strided_slice %60 {offsets = [0, 32], sizes = [2, 32], strides = [1, 1]} : vector<2x128xf32> to vector<2x32xf32>
    %63 = vector.extract_strided_slice %60 {offsets = [0, 64], sizes = [2, 32], strides = [1, 1]} : vector<2x128xf32> to vector<2x32xf32>
    %64 = vector.extract_strided_slice %60 {offsets = [0, 96], sizes = [2, 32], strides = [1, 1]} : vector<2x128xf32> to vector<2x32xf32>
    %65 = arith.mulf %62, %52 : vector<2x32xf32>
    %66 = arith.mulf %61, %63 : vector<2x32xf32>
    %67 = arith.addf %65, %66 : vector<2x32xf32>
    %68 = math.tanh %67 : vector<2x32xf32>
    %69 = arith.mulf %64, %68 : vector<2x32xf32>
    %cst_37 = arith.constant dense<0.000000e+00> : vector<2x128xf32>
    %70 = tpu.matmul %69, %21, %cst_37 {dimension_numbers = #tpu.dot_dimension_numbers<[1], [0], [0], [1], [0, 0, 1, 1], [], []>} : vector<2x32xf32>, vector<32x128xf32>, vector<2x128xf32> -> vector<2x128xf32>
    %71 = vector.broadcast %22 : vector<1x128xf32> to vector<2x128xf32>
    %72 = arith.addf %70, %71 : vector<2x128xf32>
    %73 = math.tanh %72 : vector<2x128xf32>
    %74 = arith.mulf %73, %33 : vector<2x128xf32>
    %75 = arith.addf %74, %36 : vector<2x128xf32>
    %76 = vector.extract_strided_slice %75 {offsets = [0, 0], sizes = [2, 32], strides = [1, 1]} : vector<2x128xf32> to vector<2x32xf32>
    %77 = vector.extract_strided_slice %75 {offsets = [0, 32], sizes = [2, 32], strides = [1, 1]} : vector<2x128xf32> to vector<2x32xf32>
    %78 = vector.extract_strided_slice %75 {offsets = [0, 64], sizes = [2, 32], strides = [1, 1]} : vector<2x128xf32> to vector<2x32xf32>
    %79 = vector.extract_strided_slice %75 {offsets = [0, 96], sizes = [2, 32], strides = [1, 1]} : vector<2x128xf32> to vector<2x32xf32>
    %80 = arith.mulf %77, %67 : vector<2x32xf32>
    %81 = arith.mulf %76, %78 : vector<2x32xf32>
    %82 = arith.addf %80, %81 : vector<2x32xf32>
    %83 = math.tanh %82 : vector<2x32xf32>
    %84 = arith.mulf %79, %83 : vector<2x32xf32>
    %85 = vector.extract_strided_slice %38 {offsets = [4, 0], sizes = [2, 128], strides = [1, 1]} : vector<16x128xf32> to vector<2x128xf32>
    %cst_38 = arith.constant dense<0.000000e+00> : vector<2x128xf32>
    %86 = tpu.matmul %84, %19, %cst_38 {dimension_numbers = #tpu.dot_dimension_numbers<[1], [0], [0], [1], [0, 0, 1, 1], [], []>} : vector<2x32xf32>, vector<32x128xf32>, vector<2x128xf32> -> vector<2x128xf32>
    %87 = arith.addf %85, %86 : vector<2x128xf32>
    %88 = vector.broadcast %20 : vector<1x128xf32> to vector<2x128xf32>
    %89 = arith.addf %87, %88 : vector<2x128xf32>
    %90 = math.tanh %89 : vector<2x128xf32>
    %91 = arith.mulf %90, %33 : vector<2x128xf32>
    %92 = arith.addf %91, %36 : vector<2x128xf32>
    %93 = vector.extract_strided_slice %92 {offsets = [0, 0], sizes = [2, 32], strides = [1, 1]} : vector<2x128xf32> to vector<2x32xf32>
    %94 = vector.extract_strided_slice %92 {offsets = [0, 32], sizes = [2, 32], strides = [1, 1]} : vector<2x128xf32> to vector<2x32xf32>
    %95 = vector.extract_strided_slice %92 {offsets = [0, 64], sizes = [2, 32], strides = [1, 1]} : vector<2x128xf32> to vector<2x32xf32>
    %96 = vector.extract_strided_slice %92 {offsets = [0, 96], sizes = [2, 32], strides = [1, 1]} : vector<2x128xf32> to vector<2x32xf32>
    %97 = arith.mulf %94, %82 : vector<2x32xf32>
    %98 = arith.mulf %93, %95 : vector<2x32xf32>
    %99 = arith.addf %97, %98 : vector<2x32xf32>
    %100 = math.tanh %99 : vector<2x32xf32>
    %101 = arith.mulf %96, %100 : vector<2x32xf32>
    %102 = vector.extract_strided_slice %38 {offsets = [6, 0], sizes = [2, 128], strides = [1, 1]} : vector<16x128xf32> to vector<2x128xf32>
    %cst_39 = arith.constant dense<0.000000e+00> : vector<2x128xf32>
    %103 = tpu.matmul %101, %19, %cst_39 {dimension_numbers = #tpu.dot_dimension_numbers<[1], [0], [0], [1], [0, 0, 1, 1], [], []>} : vector<2x32xf32>, vector<32x128xf32>, vector<2x128xf32> -> vector<2x128xf32>
    %104 = arith.addf %102, %103 : vector<2x128xf32>
    %105 = vector.broadcast %20 : vector<1x128xf32> to vector<2x128xf32>
    %106 = arith.addf %104, %105 : vector<2x128xf32>
    %107 = math.tanh %106 : vector<2x128xf32>
    %108 = arith.mulf %107, %33 : vector<2x128xf32>
    %109 = arith.addf %108, %36 : vector<2x128xf32>
    %110 = vector.extract_strided_slice %109 {offsets = [0, 0], sizes = [2, 32], strides = [1, 1]} : vector<2x128xf32> to vector<2x32xf32>
    %111 = vector.extract_strided_slice %109 {offsets = [0, 32], sizes = [2, 32], strides = [1, 1]} : vector<2x128xf32> to vector<2x32xf32>
    %112 = vector.extract_strided_slice %109 {offsets = [0, 64], sizes = [2, 32], strides = [1, 1]} : vector<2x128xf32> to vector<2x32xf32>
    %113 = vector.extract_strided_slice %109 {offsets = [0, 96], sizes = [2, 32], strides = [1, 1]} : vector<2x128xf32> to vector<2x32xf32>
    %114 = arith.mulf %111, %99 : vector<2x32xf32>
    %115 = arith.mulf %110, %112 : vector<2x32xf32>
    %116 = arith.addf %114, %115 : vector<2x32xf32>
    %117 = math.tanh %116 : vector<2x32xf32>
    %118 = arith.mulf %113, %117 : vector<2x32xf32>
    %cst_40 = arith.constant dense<0.000000e+00> : vector<2x128xf32>
    %119 = tpu.matmul %118, %21, %cst_40 {dimension_numbers = #tpu.dot_dimension_numbers<[1], [0], [0], [1], [0, 0, 1, 1], [], []>} : vector<2x32xf32>, vector<32x128xf32>, vector<2x128xf32> -> vector<2x128xf32>
    %120 = vector.broadcast %22 : vector<1x128xf32> to vector<2x128xf32>
    %121 = arith.addf %119, %120 : vector<2x128xf32>
    %122 = math.tanh %121 : vector<2x128xf32>
    %123 = arith.mulf %122, %33 : vector<2x128xf32>
    %124 = arith.addf %123, %36 : vector<2x128xf32>
    %125 = vector.extract_strided_slice %124 {offsets = [0, 0], sizes = [2, 32], strides = [1, 1]} : vector<2x128xf32> to vector<2x32xf32>
    %126 = vector.extract_strided_slice %124 {offsets = [0, 32], sizes = [2, 32], strides = [1, 1]} : vector<2x128xf32> to vector<2x32xf32>
    %127 = vector.extract_strided_slice %124 {offsets = [0, 64], sizes = [2, 32], strides = [1, 1]} : vector<2x128xf32> to vector<2x32xf32>
    %128 = vector.extract_strided_slice %124 {offsets = [0, 96], sizes = [2, 32], strides = [1, 1]} : vector<2x128xf32> to vector<2x32xf32>
    %129 = arith.mulf %126, %116 : vector<2x32xf32>
    %130 = arith.mulf %125, %127 : vector<2x32xf32>
    %131 = arith.addf %129, %130 : vector<2x32xf32>
    %132 = math.tanh %131 : vector<2x32xf32>
    %133 = arith.mulf %128, %132 : vector<2x32xf32>
    %134 = vector.extract_strided_slice %38 {offsets = [10, 0], sizes = [2, 128], strides = [1, 1]} : vector<16x128xf32> to vector<2x128xf32>
    %cst_41 = arith.constant dense<0.000000e+00> : vector<2x128xf32>
    %135 = tpu.matmul %133, %19, %cst_41 {dimension_numbers = #tpu.dot_dimension_numbers<[1], [0], [0], [1], [0, 0, 1, 1], [], []>} : vector<2x32xf32>, vector<32x128xf32>, vector<2x128xf32> -> vector<2x128xf32>
    %136 = arith.addf %134, %135 : vector<2x128xf32>
    %137 = vector.broadcast %20 : vector<1x128xf32> to vector<2x128xf32>
    %138 = arith.addf %136, %137 : vector<2x128xf32>
    %139 = math.tanh %138 : vector<2x128xf32>
    %140 = arith.mulf %139, %33 : vector<2x128xf32>
    %141 = arith.addf %140, %36 : vector<2x128xf32>
    %142 = vector.extract_strided_slice %141 {offsets = [0, 0], sizes = [2, 32], strides = [1, 1]} : vector<2x128xf32> to vector<2x32xf32>
    %143 = vector.extract_strided_slice %141 {offsets = [0, 32], sizes = [2, 32], strides = [1, 1]} : vector<2x128xf32> to vector<2x32xf32>
    %144 = vector.extract_strided_slice %141 {offsets = [0, 64], sizes = [2, 32], strides = [1, 1]} : vector<2x128xf32> to vector<2x32xf32>
    %145 = vector.extract_strided_slice %141 {offsets = [0, 96], sizes = [2, 32], strides = [1, 1]} : vector<2x128xf32> to vector<2x32xf32>
    %146 = arith.mulf %143, %131 : vector<2x32xf32>
    %147 = arith.mulf %142, %144 : vector<2x32xf32>
    %148 = arith.addf %146, %147 : vector<2x32xf32>
    %149 = math.tanh %148 : vector<2x32xf32>
    %150 = arith.mulf %145, %149 : vector<2x32xf32>
    %cst_42 = arith.constant dense<0.000000e+00> : vector<2x128xf32>
    %151 = tpu.matmul %150, %21, %cst_42 {dimension_numbers = #tpu.dot_dimension_numbers<[1], [0], [0], [1], [0, 0, 1, 1], [], []>} : vector<2x32xf32>, vector<32x128xf32>, vector<2x128xf32> -> vector<2x128xf32>
    %152 = vector.broadcast %22 : vector<1x128xf32> to vector<2x128xf32>
    %153 = arith.addf %151, %152 : vector<2x128xf32>
    %154 = math.tanh %153 : vector<2x128xf32>
    %155 = arith.mulf %154, %33 : vector<2x128xf32>
    %156 = arith.addf %155, %36 : vector<2x128xf32>
    %157 = vector.extract_strided_slice %156 {offsets = [0, 0], sizes = [2, 32], strides = [1, 1]} : vector<2x128xf32> to vector<2x32xf32>
    %158 = vector.extract_strided_slice %156 {offsets = [0, 32], sizes = [2, 32], strides = [1, 1]} : vector<2x128xf32> to vector<2x32xf32>
    %159 = vector.extract_strided_slice %156 {offsets = [0, 64], sizes = [2, 32], strides = [1, 1]} : vector<2x128xf32> to vector<2x32xf32>
    %160 = vector.extract_strided_slice %156 {offsets = [0, 96], sizes = [2, 32], strides = [1, 1]} : vector<2x128xf32> to vector<2x32xf32>
    %161 = arith.mulf %158, %148 : vector<2x32xf32>
    %162 = arith.mulf %157, %159 : vector<2x32xf32>
    %163 = arith.addf %161, %162 : vector<2x32xf32>
    %164 = math.tanh %163 : vector<2x32xf32>
    %165 = arith.mulf %160, %164 : vector<2x32xf32>
    %166 = tpu.concatenate %54, %69, %84, %101, %118, %133, %150, %165 in 0 : vector<2x32xf32>, vector<2x32xf32>, vector<2x32xf32>, vector<2x32xf32>, vector<2x32xf32>, vector<2x32xf32>, vector<2x32xf32>, vector<2x32xf32> -> vector<16x32xf32>
    %cst_43 = arith.constant dense<0.000000e+00> : vector<16x4xf32>
    %167 = tpu.matmul %166, %23, %cst_43 {dimension_numbers = #tpu.dot_dimension_numbers<[1], [0], [0], [1], [0, 0, 1, 1], [], []>} : vector<16x32xf32>, vector<32x4xf32>, vector<16x4xf32> -> vector<16x4xf32>
    %168 = vector.broadcast %24 : vector<1x4xf32> to vector<16x4xf32>
    %169 = arith.addf %167, %168 : vector<16x4xf32>
    %c0_44 = arith.constant 0 : index
    %c0_45 = arith.constant 0 : index
    %170 = vector.load %arg13[%c0_44, %c0_45] : memref<16x4xf32, #tpu.memory_space<vmem>>, vector<16x4xf32>
    tpu.vector_store %arg13[%c0_44, %c0_45], %169 {strides = array<i32>} : memref<16x4xf32, #tpu.memory_space<vmem>>, vector<16x4xf32>,
    return
  }
}

</mosaic_0001>

<llo_original>
// kernel: _fused_forward.1
$region0: #{_fused_forward.1}
  #allocation0 [shape = 'u32[]', space=smem, size = 0x4, offset = 0x4, fixed_abs, tag = 'smem constant byte address 0x4 - core index']
  #allocation1 [shape = 'u32[144,128]{1,0:T(1,128)}', space=vmem, size = 0x12000, scoped, tag = 'internal scratch']
  %s0 = inlined_call_operand.vmem [shape: f32[36,512], index: 0, kind: input, shape index: {}]
  %s1 = inlined_call_operand.vmem [shape: f32[8,36], index: 1, kind: input, shape index: {}]
  %s2 = inlined_call_operand.vmem [shape: f32[8,1], index: 2, kind: input, shape index: {}]
  %s3 = inlined_call_operand.vmem [shape: f32[8,4], index: 3, kind: input, shape index: {}]
  %s4 = inlined_call_operand.vmem [shape: f32[1,4], index: 4, kind: input, shape index: {}]
  %s5 = inlined_call_operand.vmem [shape: f32[16,4], index: 5, kind: input, shape index: {}]
  %s6 = inlined_call_operand.vmem [shape: f32[4,128], index: 6, kind: input, shape index: {}]
  %s7 = inlined_call_operand.vmem [shape: f32[32,128], index: 7, kind: input, shape index: {}]
  %s8 = inlined_call_operand.vmem [shape: f32[1,128], index: 8, kind: input, shape index: {}]
  %s9 = inlined_call_operand.vmem [shape: f32[32,128], index: 9, kind: input, shape index: {}]
  %s10 = inlined_call_operand.vmem [shape: f32[1,128], index: 10, kind: input, shape index: {}]
  %s11 = inlined_call_operand.vmem [shape: f32[32,4], index: 11, kind: input, shape index: {}]
  %s12 = inlined_call_operand.vmem [shape: f32[1,4], index: 12, kind: input, shape index: {}]
  %s13 = inlined_call_operand.vmem [shape: f32[16,4], index: 13, kind: output, shape index: {}]
  %s14 = sld [smem:[#allocation0]]
  $region62: #{_fused_forward.1} parent=0
    _
  %s16 = ssub.s32 1, %s14
  %s17 = scalar_select 0, %s16, %s14
  // Predicated region
  $region2: #{_fused_forward.1} parent=0 // pred_check
    _
  $region3: #{_fused_forward.1} parent=0 // pred_check_branch
    %19 = sbr.rel (0) target = $region5
  $region4: #{_fused_forward.1} parent=0 // pred_region
    _
  $region5: #{_fused_forward.1} parent=0 // pred_fallthru
    _
  // Predicated region
  $region6: #{_fused_forward.1} parent=0 // pred_check
    _
  $region7: #{_fused_forward.1} parent=0 // pred_check_branch
    %21 = sbr.rel (0) target = $region9
  $region8: #{_fused_forward.1} parent=0 // pred_region
    _
  $region9: #{_fused_forward.1} parent=0 // pred_fallthru
    _
  // Predicated region
  $region10: #{_fused_forward.1} parent=0 // pred_check
    _
  $region11: #{_fused_forward.1} parent=0 // pred_check_branch
    %23 = sbr.rel (0) target = $region13
  $region12: #{_fused_forward.1} parent=0 // pred_region
    _
  $region13: #{_fused_forward.1} parent=0 // pred_fallthru
    _
  // Predicated region
  $region14: #{_fused_forward.1} parent=0 // pred_check
    _
  $region15: #{_fused_forward.1} parent=0 // pred_check_branch
    %25 = sbr.rel (0) target = $region17
  $region16: #{_fused_forward.1} parent=0 // pred_region
    _
  $region17: #{_fused_forward.1} parent=0 // pred_fallthru
    _
  // Predicated region
  $region18: #{_fused_forward.1} parent=0 // pred_check
    _
  $region19: #{_fused_forward.1} parent=0 // pred_check_branch
    %27 = sbr.rel (0) target = $region21
  $region20: #{_fused_forward.1} parent=0 // pred_region
    _
  $region21: #{_fused_forward.1} parent=0 // pred_fallthru
    _
  // Predicated region
  $region22: #{_fused_forward.1} parent=0 // pred_check
    _
  $region23: #{_fused_forward.1} parent=0 // pred_check_branch
    %29 = sbr.rel (0) target = $region25
  $region24: #{_fused_forward.1} parent=0 // pred_region
    _
  $region25: #{_fused_forward.1} parent=0 // pred_fallthru
    _
  // Predicated region
  $region26: #{_fused_forward.1} parent=0 // pred_check
    _
  $region27: #{_fused_forward.1} parent=0 // pred_check_branch
    %31 = sbr.rel (0) target = $region29
  $region28: #{_fused_forward.1} parent=0 // pred_region
    _
  $region29: #{_fused_forward.1} parent=0 // pred_fallthru
    _
  // Predicated region
  $region30: #{_fused_forward.1} parent=0 // pred_check
    _
  $region31: #{_fused_forward.1} parent=0 // pred_check_branch
    %33 = sbr.rel (0) target = $region33
  $region32: #{_fused_forward.1} parent=0 // pred_region
    _
  $region33: #{_fused_forward.1} parent=0 // pred_fallthru
    _
  // Predicated region
  $region34: #{_fused_forward.1} parent=0 // pred_check
    _
  $region35: #{_fused_forward.1} parent=0 // pred_check_branch
    %35 = sbr.rel (0) target = $region37
  $region36: #{_fused_forward.1} parent=0 // pred_region
    _
  $region37: #{_fused_forward.1} parent=0 // pred_fallthru
    _
  // Predicated region
  $region38: #{_fused_forward.1} parent=0 // pred_check
    _
  $region39: #{_fused_forward.1} parent=0 // pred_check_branch
    %37 = sbr.rel (0) target = $region41
  $region40: #{_fused_forward.1} parent=0 // pred_region
    _
  $region41: #{_fused_forward.1} parent=0 // pred_fallthru
    _
  // Predicated region
  $region42: #{_fused_forward.1} parent=0 // pred_check
    _
  $region43: #{_fused_forward.1} parent=0 // pred_check_branch
    %39 = sbr.rel (0) target = $region45
  $region44: #{_fused_forward.1} parent=0 // pred_region
    _
  $region45: #{_fused_forward.1} parent=0 // pred_fallthru
    _
  // Predicated region
  $region46: #{_fused_forward.1} parent=0 // pred_check
    _
  $region47: #{_fused_forward.1} parent=0 // pred_check_branch
    %41 = sbr.rel (0) target = $region49
  $region48: #{_fused_forward.1} parent=0 // pred_region
    _
  $region49: #{_fused_forward.1} parent=0 // pred_fallthru
    _
  // Predicated region
  $region50: #{_fused_forward.1} parent=0 // pred_check
    _
  $region51: #{_fused_forward.1} parent=0 // pred_check_branch
    %43 = sbr.rel (0) target = $region53
  $region52: #{_fused_forward.1} parent=0 // pred_region
    _
  $region53: #{_fused_forward.1} parent=0 // pred_fallthru
    _
  %v44 = vld [vmem:[%s1] sm:$0xff]
  %v45 = vld [vmem:[%s0] sm:$0xff]
  %v46 = vld [vmem:[%s0 + $0x8] sm:$0xff]
  %v47 = vld [vmem:[%s0 + $0x10] sm:$0xff]
  %v48 = vld [vmem:[%s0 + $0x18] sm:$0xff]
  %v49 = vld [vmem:[%s0 + $0x20] sm:$0xff]
  %v50 = vld [vmem:[%s0 + $0x28] sm:$0xff]
  %v51 = vld [vmem:[%s0 + $0x30] sm:$0xff]
  %v52 = vld [vmem:[%s0 + $0x38] sm:$0xff]
  %v53 = vld [vmem:[%s0 + $0x40] sm:$0xff]
  %v54 = vld [vmem:[%s0 + $0x48] sm:$0xff]
  %v55 = vld [vmem:[%s0 + $0x50] sm:$0xff]
  %v56 = vld [vmem:[%s0 + $0x58] sm:$0xff]
  %v57 = vld [vmem:[%s0 + $0x60] sm:$0xff]
  %v58 = vld [vmem:[%s0 + $0x68] sm:$0xff]
  %v59 = vld [vmem:[%s0 + $0x70] sm:$0xff]
  %v60 = vld [vmem:[%s0 + $0x78] sm:$0xff]
  %v61 = vld [vmem:[%s0 + $0x80] sm:$0xf]
  %v62 = vld [vmem:[%s0 + $0x88] sm:$0xf]
  %v63 = vld [vmem:[%s0 + $0x90] sm:$0xf]
  %v64 = vld [vmem:[%s0 + $0x98] sm:$0xf]
  %v65 = vld [vmem:[%s2] sm:$0xff]
  %67 = vset.pattern.permute.xlu0 0
  %68 = vperm.xlu0 %67, %v65
  %v69 = vpop.permute.xlu0 %68
  %vm71 = vcmask 293888
  %v73 = vsel %vm71, %v44, 0
  %vm75 = vcmask 1043456
  %v77 = vsel %vm75, %v61, 0
  %v80 = vsel %vm75, %v62, 0
  %v83 = vsel %vm75, %v63, 0
  %v86 = vsel %vm75, %v64, 0
  %88 = vmatprep.subr.mxu0 0.0
  %89 = vmatpush1.msra.mxu0 0.0
  %90 = vmatprep.subr.mxu0 0.0
  %91 = vmatpush1.msra.mxu0 0.0
  %92 = vmatprep.subr.mxu0 0.0
  %93 = vmatpush1.msra.mxu0 0.0
  %94 = vmatprep.subr.mxu0 0.0
  %95 = vmatpush1.msra.mxu0 0.0
  %96 = vmatprep.subr.mxu0 0.0
  %97 = vmatpush1.msra.mxu0 0.0
  %98 = vmatprep.subr.mxu0 0.0
  %99 = vmatpush1.msra.mxu0 0.0
  %100 = vmatprep.subr.mxu0 0.0
  %101 = vmatpush1.msra.mxu0 0.0
  %102 = vmatprep.subr.mxu0 0.0
  %103 = vmatpush1.msra.mxu0 0.0
  %104 = vmatprep.subr.mxu0 0.0
  %105 = vmatpush1.msra.mxu0 0.0
  %106 = vmatprep.subr.mxu0 0.0
  %107 = vmatpush1.msra.mxu0 0.0
  %108 = vmatprep.subr.mxu0 0.0
  %109 = vmatpush1.msra.mxu0 0.0
  %110 = vmatprep.subr.mxu0 %v80
  %111 = vmatpush1.msra.mxu0 %v77
  %112 = vmatprep.subr.mxu0 %v58
  %113 = vmatpush1.msra.mxu0 %v57
  %114 = vmatprep.subr.mxu0 %v54
  %115 = vmatpush1.msra.mxu0 %v53
  %116 = vmatprep.subr.mxu0 %v50
  %117 = vmatpush1.msra.mxu0 %v49
  %118 = vmatprep.subr.mxu0 %v46
  %119 = vmatpush1.msra.mxu0 %v45
  %120 = vmatprep.subr.mxu0 0.0
  %121 = vmatpush2.msra.mxu0 0.0
  %122 = vmatprep.subr.mxu0 0.0
  %123 = vmatpush2.msra.mxu0 0.0
  %124 = vmatprep.subr.mxu0 0.0
  %125 = vmatpush2.msra.mxu0 0.0
  %126 = vmatprep.subr.mxu0 0.0
  %127 = vmatpush2.msra.mxu0 0.0
  %128 = vmatprep.subr.mxu0 0.0
  %129 = vmatpush2.msra.mxu0 0.0
  %130 = vmatprep.subr.mxu0 0.0
  %131 = vmatpush2.msra.mxu0 0.0
  %132 = vmatprep.subr.mxu0 0.0
  %133 = vmatpush2.msra.mxu0 0.0
  %134 = vmatprep.subr.mxu0 0.0
  %135 = vmatpush2.msra.mxu0 0.0
  %136 = vmatprep.subr.mxu0 0.0
  %137 = vmatpush2.msra.mxu0 0.0
  %138 = vmatprep.subr.mxu0 0.0
  %139 = vmatpush2.msra.mxu0 0.0
  %140 = vmatprep.subr.mxu0 0.0
  %141 = vmatpush2.msra.mxu0 0.0
  %142 = vmatprep.subr.mxu0 0.0
  %143 = vmatpush2.msra.mxu0 0.0
  %144 = vmatprep.subr.mxu0 0.0
  %145 = vmatpush2.msra.mxu0 0.0
  %146 = vmatprep.subr.mxu0 0.0
  %147 = vmatpush2.msra.mxu0 0.0
  %148 = vmatprep.subr.mxu0 0.0
  %149 = vmatpush2.msra.mxu0 0.0
  %150 = vmatprep.subr.mxu0 0.0
  %151 = vmatpush2.msra.mxu0 0.0
  %152 = vmatprep.mubr.f32.mxu0 0.0
  %153 = vmatmul.mubr.f32.gmra.mxu0 %v73
  %v154 = vpop.f32.mrf.mxu0
  %v155 = vadd.f32 %v69, %v154
  %v156 = vpop.f32.mrf.mxu0
  %v157 = vadd.f32 %v69, %v156
  %158 = vdwg.mxu0
  %159 = vmatprep.subr.mxu0 0.0
  %160 = vmatpush1.msra.mxu0 0.0
  %161 = vmatprep.subr.mxu0 0.0
  %162 = vmatpush1.msra.mxu0 0.0
  %163 = vmatprep.subr.mxu0 0.0
  %164 = vmatpush1.msra.mxu0 0.0
  %165 = vmatprep.subr.mxu0 0.0
  %166 = vmatpush1.msra.mxu0 0.0
  %167 = vmatprep.subr.mxu0 0.0
  %168 = vmatpush1.msra.mxu0 0.0
  %169 = vmatprep.subr.mxu0 0.0
  %170 = vmatpush1.msra.mxu0 0.0
  %171 = vmatprep.subr.mxu0 0.0
  %172 = vmatpush1.msra.mxu0 0.0
  %173 = vmatprep.subr.mxu0 0.0
  %174 = vmatpush1.msra.mxu0 0.0
  %175 = vmatprep.subr.mxu0 0.0
  %176 = vmatpush1.msra.mxu0 0.0
  %177 = vmatprep.subr.mxu0 0.0
  %178 = vmatpush1.msra.mxu0 0.0
  %179 = vmatprep.subr.mxu0 0.0
  %180 = vmatpush1.msra.mxu0 0.0
  %181 = vmatprep.subr.mxu0 %v86
  %182 = vmatpush1.msra.mxu0 %v83
  %183 = vmatprep.subr.mxu0 %v60
  %184 = vmatpush1.msra.mxu0 %v59
  %185 = vmatprep.subr.mxu0 %v56
  %186 = vmatpush1.msra.mxu0 %v55
  %187 = vmatprep.subr.mxu0 %v52
  %188 = vmatpush1.msra.mxu0 %v51
  %189 = vmatprep.subr.mxu0 %v48
  %190 = vmatpush1.msra.mxu0 %v47
  %191 = vmatprep.subr.mxu0 0.0
  %192 = vmatpush2.msra.mxu0 0.0
  %193 = vmatprep.subr.mxu0 0.0
  %194 = vmatpush2.msra.mxu0 0.0
  %195 = vmatprep.subr.mxu0 0.0
  %196 = vmatpush2.msra.mxu0 0.0
  %197 = vmatprep.subr.mxu0 0.0
  %198 = vmatpush2.msra.mxu0 0.0
  %199 = vmatprep.subr.mxu0 0.0
  %200 = vmatpush2.msra.mxu0 0.0
  %201 = vmatprep.subr.mxu0 0.0
  %202 = vmatpush2.msra.mxu0 0.0
  %203 = vmatprep.subr.mxu0 0.0
  %204 = vmatpush2.msra.mxu0 0.0
  %205 = vmatprep.subr.mxu0 0.0
  %206 = vmatpush2.msra.mxu0 0.0
  %207 = vmatprep.subr.mxu0 0.0
  %208 = vmatpush2.msra.mxu0 0.0
  %209 = vmatprep.subr.mxu0 0.0
  %210 = vmatpush2.msra.mxu0 0.0
  %211 = vmatprep.subr.mxu0 0.0
  %212 = vmatpush2.msra.mxu0 0.0
  %213 = vmatprep.subr.mxu0 0.0
  %214 = vmatpush2.msra.mxu0 0.0
  %215 = vmatprep.subr.mxu0 0.0
  %216 = vmatpush2.msra.mxu0 0.0
  %217 = vmatprep.subr.mxu0 0.0
  %218 = vmatpush2.msra.mxu0 0.0
  %219 = vmatprep.subr.mxu0 0.0
  %220 = vmatpush2.msra.mxu0 0.0
  %221 = vmatprep.subr.mxu0 0.0
  %222 = vmatpush2.msra.mxu0 0.0
  %223 = vmatprep.mubr.f32.mxu0 0.0
  %224 = vmatmul.mubr.f32.gmra.mxu0 %v73
  %v225 = vpop.f32.mrf.mxu0
  %v226 = vadd.f32 %v69, %v225
  %v227 = vpop.f32.mrf.mxu0
  %v228 = vadd.f32 %v69, %v227
  %229 = vdwg.mxu0
  %v230 = vmax.f32 %v155, 0.0
  %v231 = vmax.f32 %v157, 0.0
  %v232 = vmax.f32 %v226, 0.0
  %v233 = vmax.f32 %v228, 0.0
  %v234 = vcombine.high %v230, 0.0
  %v236 = vunpack.c.l.s4 1983009808
  %v237 = vunpack.c.0.s8 %v236
  %v238 = vlaneseq
  %v239 = vshrl.u32 %v238, 7
  %v240 = vsub.s32 %v237, %v239
  %v241 = vrot.slane %v230, %v240
  %v243 = vunpack.c.l.s4 1983009808
  %v244 = vunpack.c.0.s8 %v243
  %v245 = vlaneseq
  %v246 = vshrl.u32 %v245, 7
  %v247 = vsub.s32 %v244, %v246
  %v248 = vrot.slane %v234, %v247
  %v249 = vcombine.high %v232, 0.0
  %v251 = vunpack.c.l.s4 1983009808
  %v252 = vunpack.c.0.s8 %v251
  %v253 = vlaneseq
  %v254 = vshrl.u32 %v253, 7
  %v255 = vsub.s32 %v252, %v254
  %v256 = vrot.slane %v232, %v255
  %v258 = vunpack.c.l.s4 1983009808
  %v259 = vunpack.c.0.s8 %v258
  %v260 = vlaneseq
  %v261 = vshrl.u32 %v260, 7
  %v262 = vsub.s32 %v259, %v261
  %v263 = vrot.slane %v249, %v262
  %v264 = vcombine.low %v241, %v256
  %v265 = vcombine.high %v241, %v256
  %v267 = vunpack.c.l.s4 1934713408
  %v268 = vunpack.c.0.s8 %v267
  %v269 = vlaneseq
  %v270 = vshrl.u32 %v269, 7
  %v271 = vsub.s32 %v268, %v270
  %v272 = vrot.slane %v264, %v271
  %v274 = vunpack.c.l.s4 1934713408
  %v275 = vunpack.c.0.s8 %v274
  %v276 = vlaneseq
  %v277 = vshrl.u32 %v276, 7
  %v278 = vsub.s32 %v275, %v277
  %v279 = vrot.slane %v265, %v278
  %v280 = vcombine.low %v248, %v263
  %v281 = vcombine.high %v248, %v263
  %v283 = vunpack.c.l.s4 1934713408
  %v284 = vunpack.c.0.s8 %v283
  %v285 = vlaneseq
  %v286 = vshrl.u32 %v285, 7
  %v287 = vsub.s32 %v284, %v286
  %v288 = vrot.slane %v280, %v287
  %v290 = vunpack.c.l.s4 1934713408
  %v291 = vunpack.c.0.s8 %v290
  %v292 = vlaneseq
  %v293 = vshrl.u32 %v292, 7
  %v294 = vsub.s32 %v291, %v293
  %v295 = vrot.slane %v281, %v294
  %v296 = vcombine.high %v272, 0.0
  %v297 = vcombine.high %v279, 0.0
  %v298 = vcombine.high %v288, 0.0
  %v299 = vcombine.high %v295, 0.0
  %v300 = vcombine.high %v231, 0.0
  %v302 = vunpack.c.l.s4 1983009808
  %v303 = vunpack.c.0.s8 %v302
  %v304 = vlaneseq
  %v305 = vshrl.u32 %v304, 7
  %v306 = vsub.s32 %v303, %v305
  %v307 = vrot.slane %v231, %v306
  %v309 = vunpack.c.l.s4 1983009808
  %v310 = vunpack.c.0.s8 %v309
  %v311 = vlaneseq
  %v312 = vshrl.u32 %v311, 7
  %v313 = vsub.s32 %v310, %v312
  %v314 = vrot.slane %v300, %v313
  %v315 = vcombine.high %v233, 0.0
  %v317 = vunpack.c.l.s4 1983009808
  %v318 = vunpack.c.0.s8 %v317
  %v319 = vlaneseq
  %v320 = vshrl.u32 %v319, 7
  %v321 = vsub.s32 %v318, %v320
  %v322 = vrot.slane %v233, %v321
  %v324 = vunpack.c.l.s4 1983009808
  %v325 = vunpack.c.0.s8 %v324
  %v326 = vlaneseq
  %v327 = vshrl.u32 %v326, 7
  %v328 = vsub.s32 %v325, %v327
  %v329 = vrot.slane %v315, %v328
  %v330 = vcombine.low %v307, %v322
  %v331 = vcombine.high %v307, %v322
  %v333 = vunpack.c.l.s4 1934713408
  %v334 = vunpack.c.0.s8 %v333
  %v335 = vlaneseq
  %v336 = vshrl.u32 %v335, 7
  %v337 = vsub.s32 %v334, %v336
  %v338 = vrot.slane %v330, %v337
  %v340 = vunpack.c.l.s4 1934713408
  %v341 = vunpack.c.0.s8 %v340
  %v342 = vlaneseq
  %v343 = vshrl.u32 %v342, 7
  %v344 = vsub.s32 %v341, %v343
  %v345 = vrot.slane %v331, %v344
  %v346 = vcombine.low %v314, %v329
  %v347 = vcombine.high %v314, %v329
  %v349 = vunpack.c.l.s4 1934713408
  %v350 = vunpack.c.0.s8 %v349
  %v351 = vlaneseq
  %v352 = vshrl.u32 %v351, 7
  %v353 = vsub.s32 %v350, %v352
  %v354 = vrot.slane %v346, %v353
  %v356 = vunpack.c.l.s4 1934713408
  %v357 = vunpack.c.0.s8 %v356
  %v358 = vlaneseq
  %v359 = vshrl.u32 %v358, 7
  %v360 = vsub.s32 %v357, %v359
  %v361 = vrot.slane %v347, %v360
  %v362 = vcombine.high %v338, 0.0
  %v363 = vcombine.high %v345, 0.0
  %v364 = vcombine.high %v354, 0.0
  %v365 = vcombine.high %v361, 0.0
  %vm366 = vcmask 1041408
  %v367 = vsel %vm366, %v272, 0.0
  %v368 = vsel %vm366, %v338, 0.0
  %v369 = vadd.f32 %v367, %v368
  %370 = vadd.xlane.f32.xlu0 %v369
  %v371 = vpop.xlane.xlu0 %370
  %v372 = vsel %vm366, %v296, 0.0
  %v373 = vsel %vm366, %v362, 0.0
  %v374 = vadd.f32 %v372, %v373
  %375 = vadd.xlane.f32.xlu0 %v374
  %v376 = vpop.xlane.xlu0 %375
  %v377 = vsel %vm366, %v279, 0.0
  %v378 = vsel %vm366, %v345, 0.0
  %v379 = vadd.f32 %v377, %v378
  %380 = vadd.xlane.f32.xlu0 %v379
  %v381 = vpop.xlane.xlu0 %380
  %v382 = vsel %vm366, %v297, 0.0
  %v383 = vsel %vm366, %v363, 0.0
  %v384 = vadd.f32 %v382, %v383
  %385 = vadd.xlane.f32.xlu0 %v384
  %v386 = vpop.xlane.xlu0 %385
  %v387 = vsel %vm366, %v288, 0.0
  %v388 = vsel %vm366, %v354, 0.0
  %v389 = vadd.f32 %v387, %v388
  %390 = vadd.xlane.f32.xlu0 %v389
  %v391 = vpop.xlane.xlu0 %390
  %v392 = vsel %vm366, %v298, 0.0
  %v393 = vsel %vm366, %v364, 0.0
  %v394 = vadd.f32 %v392, %v393
  %395 = vadd.xlane.f32.xlu0 %v394
  %v396 = vpop.xlane.xlu0 %395
  %v397 = vsel %vm366, %v295, 0.0
  %v398 = vsel %vm366, %v361, 0.0
  %v399 = vadd.f32 %v397, %v398
  %400 = vadd.xlane.f32.xlu0 %v399
  %v401 = vpop.xlane.xlu0 %400
  %v402 = vsel %vm366, %v299, 0.0
  %v403 = vsel %vm366, %v365, 0.0
  %v404 = vadd.f32 %v402, %v403
  %405 = vadd.xlane.f32.xlu0 %v404
  %v406 = vpop.xlane.xlu0 %405
  %v407 = vrcp.pop 256.0
  %v408 = vmul.f32 %v371, %v407
  %v409 = vmul.f32 %v376, %v407
  %v410 = vmul.f32 %v381, %v407
  %v411 = vmul.f32 %v386, %v407
  %v412 = vmul.f32 %v391, %v407
  %v413 = vmul.f32 %v396, %v407
  %v414 = vmul.f32 %v401, %v407
  %v415 = vmul.f32 %v406, %v407
  %v424 = vlaneseq
  %v425 = vand.u32 %v424, 127
  %v426 = vlaneseq
  %v427 = vshrl.u32 %v426, 7
  %v428 = vsub.s32 %v425, %v427
  %v429 = vrot.slane %v408, %v428
  %v430 = vlaneseq
  %v431 = vshrl.u32 %v430, 7
  %v432 = vsub.s32 %v425, %v431
  %v433 = vrot.slane %v409, %v432
  %v434 = vlaneseq
  %v435 = vshrl.u32 %v434, 7
  %v436 = vsub.s32 %v425, %v435
  %v437 = vrot.slane %v410, %v436
  %v438 = vlaneseq
  %v439 = vshrl.u32 %v438, 7
  %v440 = vsub.s32 %v425, %v439
  %v441 = vrot.slane %v411, %v440
  %v442 = vlaneseq
  %v443 = vshrl.u32 %v442, 7
  %v444 = vsub.s32 %v425, %v443
  %v445 = vrot.slane %v412, %v444
  %v446 = vlaneseq
  %v447 = vshrl.u32 %v446, 7
  %v448 = vsub.s32 %v425, %v447
  %v449 = vrot.slane %v413, %v448
  %v450 = vlaneseq
  %v451 = vshrl.u32 %v450, 7
  %v452 = vsub.s32 %v425, %v451
  %v453 = vrot.slane %v414, %v452
  %v454 = vlaneseq
  %v455 = vshrl.u32 %v454, 7
  %v456 = vsub.s32 %v425, %v455
  %v457 = vrot.slane %v415, %v456
  %vm458 = vcmask 1041409
  %v459 = vsel %vm458, %v433, %v429
  %vm460 = vcmask 1042434
  %v461 = vsel %vm460, %v437, %v459
  %vm462 = vcmask 1043459
  %v463 = vsel %vm462, %v441, %v461
  %vm464 = vcmask 1044484
  %v465 = vsel %vm464, %v445, %v463
  %vm466 = vcmask 1045509
  %v467 = vsel %vm466, %v449, %v465
  %vm468 = vcmask 1046534
  %v469 = vsel %vm468, %v453, %v467
  %vm470 = vcmask 1047559
  %v471 = vsel %vm470, %v457, %v469
  %473 = vxpose.xlu0.b32.start [1/16] %v471, 128
  %474 = vxpose.xlu0.b32.cont [2/16] 0.0, 128
  %475 = vxpose.xlu0.b32.cont [3/16] 0.0, 128
  %476 = vxpose.xlu0.b32.cont [4/16] 0.0, 128
  %477 = vxpose.xlu0.b32.cont [5/16] 0.0, 128
  %478 = vxpose.xlu0.b32.cont [6/16] 0.0, 128
  %479 = vxpose.xlu0.b32.cont [7/16] 0.0, 128
  %480 = vxpose.xlu0.b32.cont [8/16] 0.0, 128
  %481 = vxpose.xlu0.b32.cont [9/16] 0.0, 128
  %482 = vxpose.xlu0.b32.cont [10/16] 0.0, 128
  %483 = vxpose.xlu0.b32.cont [11/16] 0.0, 128
  %484 = vxpose.xlu0.b32.cont [12/16] 0.0, 128
  %485 = vxpose.xlu0.b32.cont [13/16] 0.0, 128
  %486 = vxpose.xlu0.b32.cont [14/16] 0.0, 128
  %487 = vxpose.xlu0.b32.cont [15/16] 0.0, 128
  %488 = vxpose.xlu0.b32.end [16/16] 0.0, 128
  %v489 = vpop.trf.xlu0
  %v490 = vpop.trf.xlu0
  %v491 = vpop.trf.xlu0
  %v492 = vpop.trf.xlu0
  %v493 = vpop.trf.xlu0
  %v494 = vpop.trf.xlu0
  %v495 = vpop.trf.xlu0
  %v496 = vpop.trf.xlu0
  %v497 = vpop.trf.xlu0
  %v498 = vpop.trf.xlu0
  %v499 = vpop.trf.xlu0
  %v500 = vpop.trf.xlu0
  %v501 = vpop.trf.xlu0
  %v502 = vpop.trf.xlu0
  %v503 = vpop.trf.xlu0
  %v504 = vpop.trf.xlu0
  %v505 = vld [vmem:[%s3] sm:$0xff]
  %v506 = vld [vmem:[%s4] sm:$0x1]
  %v508 = vlaneseq
  %v509 = vshrl.u32 %v508, 7
  %v510 = vsub.s32 0, %v509
  %v511 = vrot.slane %v506, %v510
  %vm513 = vcmask 64512
  %v515 = vsel %vm513, %v489, 0
  %517 = vmatprep.subr.mxu0 0.0
  %518 = vmatpush1.msra.mxu0 0.0
  %519 = vmatprep.subr.mxu0 0.0
  %520 = vmatpush1.msra.mxu0 0.0
  %521 = vmatprep.subr.mxu0 0.0
  %522 = vmatpush1.msra.mxu0 0.0
  %523 = vmatprep.subr.mxu0 0.0
  %524 = vmatpush1.msra.mxu0 0.0
  %525 = vmatprep.subr.mxu0 0.0
  %526 = vmatpush1.msra.mxu0 0.0
  %527 = vmatprep.subr.mxu0 0.0
  %528 = vmatpush1.msra.mxu0 0.0
  %529 = vmatprep.subr.mxu0 0.0
  %530 = vmatpush1.msra.mxu0 0.0
  %531 = vmatprep.subr.mxu0 0.0
  %532 = vmatpush1.msra.mxu0 0.0
  %533 = vmatprep.subr.mxu0 0.0
  %534 = vmatpush1.msra.mxu0 0.0
  %535 = vmatprep.subr.mxu0 0.0
  %536 = vmatpush1.msra.mxu0 0.0
  %537 = vmatprep.subr.mxu0 0.0
  %538 = vmatpush1.msra.mxu0 0.0
  %539 = vmatprep.subr.mxu0 0.0
  %540 = vmatpush1.msra.mxu0 0.0
  %541 = vmatprep.subr.mxu0 0.0
  %542 = vmatpush1.msra.mxu0 0.0
  %543 = vmatprep.subr.mxu0 0.0
  %544 = vmatpush1.msra.mxu0 0.0
  %545 = vmatprep.subr.mxu0 0.0
  %546 = vmatpush1.msra.mxu0 0.0
  %547 = vmatprep.subr.mxu0 0.0
  %548 = vmatpush1.msra.mxu0 %v505
  %549 = vmatprep.subr.mxu0 0.0
  %550 = vmatpush2.msra.mxu0 0.0
  %551 = vmatprep.subr.mxu0 0.0
  %552 = vmatpush2.msra.mxu0 0.0
  %553 = vmatprep.subr.mxu0 0.0
  %554 = vmatpush2.msra.mxu0 0.0
  %555 = vmatprep.subr.mxu0 0.0
  %556 = vmatpush2.msra.mxu0 0.0
  %557 = vmatprep.subr.mxu0 0.0
  %558 = vmatpush2.msra.mxu0 0.0
  %559 = vmatprep.subr.mxu0 0.0
  %560 = vmatpush2.msra.mxu0 0.0
  %561 = vmatprep.subr.mxu0 0.0
  %562 = vmatpush2.msra.mxu0 0.0
  %563 = vmatprep.subr.mxu0 0.0
  %564 = vmatpush2.msra.mxu0 0.0
  %565 = vmatprep.subr.mxu0 0.0
  %566 = vmatpush2.msra.mxu0 0.0
  %567 = vmatprep.subr.mxu0 0.0
  %568 = vmatpush2.msra.mxu0 0.0
  %569 = vmatprep.subr.mxu0 0.0
  %570 = vmatpush2.msra.mxu0 0.0
  %571 = vmatprep.subr.mxu0 0.0
  %572 = vmatpush2.msra.mxu0 0.0
  %573 = vmatprep.subr.mxu0 0.0
  %574 = vmatpush2.msra.mxu0 0.0
  %575 = vmatprep.subr.mxu0 0.0
  %576 = vmatpush2.msra.mxu0 0.0
  %577 = vmatprep.subr.mxu0 0.0
  %578 = vmatpush2.msra.mxu0 0.0
  %579 = vmatprep.subr.mxu0 0.0
  %580 = vmatpush2.msra.mxu0 0.0
  %581 = vmatprep.mubr.f32.mxu0 0.0
  %582 = vmatmul.mubr.f32.gmra.mxu0 %v515
  %v583 = vpop.f32.mrf.mxu0
  %v584 = vadd.f32 %v511, %v583
  %v585 = vpop.f32.mrf.mxu0
  %586 = vdwg.mxu0
  %v587 = vld [vmem:[%s6] sm:$0xf]
  %v588 = vld [vmem:[%s7] sm:$0xff]
  %v589 = vld [vmem:[%s7 + $0x8] sm:$0xff]
  %v590 = vld [vmem:[%s7 + $0x10] sm:$0xff]
  %v591 = vld [vmem:[%s7 + $0x18] sm:$0xff]
  %v592 = vld [vmem:[%s8] sm:$0x1]
  %v593 = vld [vmem:[%s9] sm:$0xff]
  %v594 = vld [vmem:[%s9 + $0x8] sm:$0xff]
  %v595 = vld [vmem:[%s9 + $0x10] sm:$0xff]
  %v596 = vld [vmem:[%s9 + $0x18] sm:$0xff]
  %v597 = vld [vmem:[%s10] sm:$0x1]
  %v598 = vld [vmem:[%s11] sm:$0xff]
  %v599 = vld [vmem:[%s11 + $0x8] sm:$0xff]
  %v600 = vld [vmem:[%s11 + $0x10] sm:$0xff]
  %v601 = vld [vmem:[%s11 + $0x18] sm:$0xff]
  %v602 = vld [vmem:[%s12] sm:$0x1]
  %vm603 = vcmp.ge.s32.totalorder %v425, 64
  %vm604 = vcmp.lt.s32.totalorder %v425, 96
  %vm605 = vmand %vm603, %vm604
  %v606 = vsel %vm605, 1.0, 0.5
  %v607 = vsel %vm605, 0.0, 0.5
  %v608 = vld [vmem:[%s5] sm:$0xff]
  %v609 = vld [vmem:[%s5 + $0x8] sm:$0xff]
  %vm610 = vcmask 31744
  %v612 = vsel %vm610, %v608, 0
  %v615 = vsel %vm610, %v609, 0
  %v618 = vsel %vm75, %v587, 0
  %620 = vmatprep.subr.mxu0 0.0
  %621 = vmatpush1.msra.mxu0 0.0
  %622 = vmatprep.subr.mxu0 0.0
  %623 = vmatpush1.msra.mxu0 0.0
  %624 = vmatprep.subr.mxu0 0.0
  %625 = vmatpush1.msra.mxu0 0.0
  %626 = vmatprep.subr.mxu0 0.0
  %627 = vmatpush1.msra.mxu0 0.0
  %628 = vmatprep.subr.mxu0 0.0
  %629 = vmatpush1.msra.mxu0 0.0
  %630 = vmatprep.subr.mxu0 0.0
  %631 = vmatpush1.msra.mxu0 0.0
  %632 = vmatprep.subr.mxu0 0.0
  %633 = vmatpush1.msra.mxu0 0.0
  %634 = vmatprep.subr.mxu0 0.0
  %635 = vmatpush1.msra.mxu0 0.0
  %636 = vmatprep.subr.mxu0 0.0
  %637 = vmatpush1.msra.mxu0 0.0
  %638 = vmatprep.subr.mxu0 0.0
  %639 = vmatpush1.msra.mxu0 0.0
  %640 = vmatprep.subr.mxu0 0.0
  %641 = vmatpush1.msra.mxu0 0.0
  %642 = vmatprep.subr.mxu0 0.0
  %643 = vmatpush1.msra.mxu0 0.0
  %644 = vmatprep.subr.mxu0 0.0
  %645 = vmatpush1.msra.mxu0 0.0
  %646 = vmatprep.subr.mxu0 0.0
  %647 = vmatpush1.msra.mxu0 0.0
  %648 = vmatprep.subr.mxu0 0.0
  %649 = vmatpush1.msra.mxu0 0.0
  %650 = vmatprep.subr.mxu0 0.0
  %651 = vmatpush1.msra.mxu0 %v618
  %652 = vmatprep.subr.mxu0 0.0
  %653 = vmatpush2.msra.mxu0 0.0
  %654 = vmatprep.subr.mxu0 0.0
  %655 = vmatpush2.msra.mxu0 0.0
  %656 = vmatprep.subr.mxu0 0.0
  %657 = vmatpush2.msra.mxu0 0.0
  %658 = vmatprep.subr.mxu0 0.0
  %659 = vmatpush2.msra.mxu0 0.0
  %660 = vmatprep.subr.mxu0 0.0
  %661 = vmatpush2.msra.mxu0 0.0
  %662 = vmatprep.subr.mxu0 0.0
  %663 = vmatpush2.msra.mxu0 0.0
  %664 = vmatprep.subr.mxu0 0.0
  %665 = vmatpush2.msra.mxu0 0.0
  %666 = vmatprep.subr.mxu0 0.0
  %667 = vmatpush2.msra.mxu0 0.0
  %668 = vmatprep.subr.mxu0 0.0
  %669 = vmatpush2.msra.mxu0 0.0
  %670 = vmatprep.subr.mxu0 0.0
  %671 = vmatpush2.msra.mxu0 0.0
  %672 = vmatprep.subr.mxu0 0.0
  %673 = vmatpush2.msra.mxu0 0.0
  %674 = vmatprep.subr.mxu0 0.0
  %675 = vmatpush2.msra.mxu0 0.0
  %676 = vmatprep.subr.mxu0 0.0
  %677 = vmatpush2.msra.mxu0 0.0
  %678 = vmatprep.subr.mxu0 0.0
  %679 = vmatpush2.msra.mxu0 0.0
  %680 = vmatprep.subr.mxu0 0.0
  %681 = vmatpush2.msra.mxu0 0.0
  %682 = vmatprep.subr.mxu0 0.0
  %683 = vmatpush2.msra.mxu0 0.0
  %684 = vmatprep.mubr.f32.mxu0 0.0
  %685 = vmatmul.mubr.f32.gmra.mxu0 %v612
  %v686 = vpop.f32.mrf.mxu0
  %v687 = vadd.f32 0.0, %v686
  %v688 = vpop.f32.mrf.mxu0
  %689 = vmatprep.mubr.f32.mxu0 0.0
  %690 = vmatmul.mubr.f32.gmra.mxu0 %v615
  %v691 = vpop.f32.mrf.mxu0
  %v692 = vadd.f32 0.0, %v691
  %v693 = vpop.f32.mrf.mxu0
  %694 = vdwg.mxu0
  %v696 = vlaneseq
  %v697 = vshrl.u32 %v696, 7
  %v698 = vsub.s32 0, %v697
  %v699 = vrot.slane %v592, %v698
  %v702 = vsel %vm610, %v584, 0
  %704 = vmatprep.subr.mxu0 0.0
  %705 = vmatpush1.msra.mxu0 0.0
  %706 = vmatprep.subr.mxu0 0.0
  %707 = vmatpush1.msra.mxu0 0.0
  %708 = vmatprep.subr.mxu0 0.0
  %709 = vmatpush1.msra.mxu0 0.0
  %710 = vmatprep.subr.mxu0 0.0
  %711 = vmatpush1.msra.mxu0 0.0
  %712 = vmatprep.subr.mxu0 0.0
  %713 = vmatpush1.msra.mxu0 0.0
  %714 = vmatprep.subr.mxu0 0.0
  %715 = vmatpush1.msra.mxu0 0.0
  %716 = vmatprep.subr.mxu0 0.0
  %717 = vmatpush1.msra.mxu0 0.0
  %718 = vmatprep.subr.mxu0 0.0
  %719 = vmatpush1.msra.mxu0 0.0
  %720 = vmatprep.subr.mxu0 0.0
  %721 = vmatpush1.msra.mxu0 0.0
  %722 = vmatprep.subr.mxu0 0.0
  %723 = vmatpush1.msra.mxu0 0.0
  %724 = vmatprep.subr.mxu0 0.0
  %725 = vmatpush1.msra.mxu0 0.0
  %726 = vmatprep.subr.mxu0 0.0
  %727 = vmatpush1.msra.mxu0 0.0
  %728 = vmatprep.subr.mxu0 0.0
  %729 = vmatpush1.msra.mxu0 0.0
  %730 = vmatprep.subr.mxu0 0.0
  %731 = vmatpush1.msra.mxu0 0.0
  %732 = vmatprep.subr.mxu0 0.0
  %733 = vmatpush1.msra.mxu0 0.0
  %734 = vmatprep.subr.mxu0 0.0
  %735 = vmatpush1.msra.mxu0 %v618
  %736 = vmatprep.subr.mxu0 0.0
  %737 = vmatpush2.msra.mxu0 0.0
  %738 = vmatprep.subr.mxu0 0.0
  %739 = vmatpush2.msra.mxu0 0.0
  %740 = vmatprep.subr.mxu0 0.0
  %741 = vmatpush2.msra.mxu0 0.0
  %742 = vmatprep.subr.mxu0 0.0
  %743 = vmatpush2.msra.mxu0 0.0
  %744 = vmatprep.subr.mxu0 0.0
  %745 = vmatpush2.msra.mxu0 0.0
  %746 = vmatprep.subr.mxu0 0.0
  %747 = vmatpush2.msra.mxu0 0.0
  %748 = vmatprep.subr.mxu0 0.0
  %749 = vmatpush2.msra.mxu0 0.0
  %750 = vmatprep.subr.mxu0 0.0
  %751 = vmatpush2.msra.mxu0 0.0
  %752 = vmatprep.subr.mxu0 0.0
  %753 = vmatpush2.msra.mxu0 0.0
  %754 = vmatprep.subr.mxu0 0.0
  %755 = vmatpush2.msra.mxu0 0.0
  %756 = vmatprep.subr.mxu0 0.0
  %757 = vmatpush2.msra.mxu0 0.0
  %758 = vmatprep.subr.mxu0 0.0
  %759 = vmatpush2.msra.mxu0 0.0
  %760 = vmatprep.subr.mxu0 0.0
  %761 = vmatpush2.msra.mxu0 0.0
  %762 = vmatprep.subr.mxu0 0.0
  %763 = vmatpush2.msra.mxu0 0.0
  %764 = vmatprep.subr.mxu0 0.0
  %765 = vmatpush2.msra.mxu0 0.0
  %766 = vmatprep.subr.mxu0 0.0
  %767 = vmatpush2.msra.mxu0 0.0
  %768 = vmatprep.mubr.f32.mxu0 0.0
  %769 = vmatmul.mubr.f32.gmra.mxu0 %v702
  %v770 = vpop.f32.mrf.mxu0
  %v771 = vadd.f32 %v699, %v770
  %v772 = vpop.f32.mrf.mxu0
  %773 = vdwg.mxu0
  %v774 = vtanh.pop %v771
  %v775 = vmul.f32 %v774, %v606
  %v776 = vadd.f32 %v775, %v607
  %v777 = vmul.f32 %v776, 0.0
  %779 = vrot.lane.b32.xlu0 %v776, 64
  %v780 = vpop.permute.xlu0 %779
  %v782 = vmul.f32 %v776, %v780
  %784 = vrot.lane.b32.xlu0 %v782, 32
  %v785 = vpop.permute.xlu0 %784
  %v787 = vadd.f32 %v777, %v785
  %v788 = vtanh.pop %v787
  %790 = vrot.lane.b32.xlu0 %v788, 64
  %v791 = vpop.permute.xlu0 %790
  %v793 = vmul.f32 %v776, %v791
  %v795 = vlaneseq
  %v796 = vshrl.u32 %v795, 7
  %v797 = vsub.s32 0, %v796
  %v798 = vrot.slane %v597, %v797
  %801 = vrot.lane.b32.xlu0 %v793, 32
  %v802 = vpop.permute.xlu0 %801
  %vm803 = vcmask 261120
  %v804 = vsel %vm803, %v802, 0
  %806 = vmatprep.subr.mxu0 0.0
  %807 = vmatpush1.msra.mxu0 0.0
  %808 = vmatprep.subr.mxu0 0.0
  %809 = vmatpush1.msra.mxu0 0.0
  %810 = vmatprep.subr.mxu0 0.0
  %811 = vmatpush1.msra.mxu0 0.0
  %812 = vmatprep.subr.mxu0 0.0
  %813 = vmatpush1.msra.mxu0 0.0
  %814 = vmatprep.subr.mxu0 0.0
  %815 = vmatpush1.msra.mxu0 0.0
  %816 = vmatprep.subr.mxu0 0.0
  %817 = vmatpush1.msra.mxu0 0.0
  %818 = vmatprep.subr.mxu0 0.0
  %819 = vmatpush1.msra.mxu0 0.0
  %820 = vmatprep.subr.mxu0 0.0
  %821 = vmatpush1.msra.mxu0 0.0
  %822 = vmatprep.subr.mxu0 0.0
  %823 = vmatpush1.msra.mxu0 0.0
  %824 = vmatprep.subr.mxu0 0.0
  %825 = vmatpush1.msra.mxu0 0.0
  %826 = vmatprep.subr.mxu0 0.0
  %827 = vmatpush1.msra.mxu0 0.0
  %828 = vmatprep.subr.mxu0 0.0
  %829 = vmatpush1.msra.mxu0 0.0
  %830 = vmatprep.subr.mxu0 0.0
  %831 = vmatpush1.msra.mxu0 %v596
  %832 = vmatprep.subr.mxu0 0.0
  %833 = vmatpush1.msra.mxu0 %v595
  %834 = vmatprep.subr.mxu0 0.0
  %835 = vmatpush1.msra.mxu0 %v594
  %836 = vmatprep.subr.mxu0 0.0
  %837 = vmatpush1.msra.mxu0 %v593
  %838 = vmatprep.subr.mxu0 0.0
  %839 = vmatpush2.msra.mxu0 0.0
  %840 = vmatprep.subr.mxu0 0.0
  %841 = vmatpush2.msra.mxu0 0.0
  %842 = vmatprep.subr.mxu0 0.0
  %843 = vmatpush2.msra.mxu0 0.0
  %844 = vmatprep.subr.mxu0 0.0
  %845 = vmatpush2.msra.mxu0 0.0
  %846 = vmatprep.subr.mxu0 0.0
  %847 = vmatpush2.msra.mxu0 0.0
  %848 = vmatprep.subr.mxu0 0.0
  %849 = vmatpush2.msra.mxu0 0.0
  %850 = vmatprep.subr.mxu0 0.0
  %851 = vmatpush2.msra.mxu0 0.0
  %852 = vmatprep.subr.mxu0 0.0
  %853 = vmatpush2.msra.mxu0 0.0
  %854 = vmatprep.subr.mxu0 0.0
  %855 = vmatpush2.msra.mxu0 0.0
  %856 = vmatprep.subr.mxu0 0.0
  %857 = vmatpush2.msra.mxu0 0.0
  %858 = vmatprep.subr.mxu0 0.0
  %859 = vmatpush2.msra.mxu0 0.0
  %860 = vmatprep.subr.mxu0 0.0
  %861 = vmatpush2.msra.mxu0 0.0
  %862 = vmatprep.subr.mxu0 0.0
  %863 = vmatpush2.msra.mxu0 0.0
  %864 = vmatprep.subr.mxu0 0.0
  %865 = vmatpush2.msra.mxu0 0.0
  %866 = vmatprep.subr.mxu0 0.0
  %867 = vmatpush2.msra.mxu0 0.0
  %868 = vmatprep.subr.mxu0 0.0
  %869 = vmatpush2.msra.mxu0 0.0
  %870 = vmatprep.mubr.f32.mxu0 0.0
  %871 = vmatmul.mubr.f32.gmra.mxu0 %v804
  %v872 = vpop.f32.mrf.mxu0
  %v873 = vadd.f32 %v798, %v872
  %v874 = vpop.f32.mrf.mxu0
  %875 = vdwg.mxu0
  %v876 = vtanh.pop %v873
  %v877 = vmul.f32 %v876, %v606
  %v878 = vadd.f32 %v877, %v607
  %v879 = vmul.f32 %v878, %v787
  %881 = vrot.lane.b32.xlu0 %v878, 64
  %v882 = vpop.permute.xlu0 %881
  %v884 = vmul.f32 %v878, %v882
  %886 = vrot.lane.b32.xlu0 %v884, 32
  %v887 = vpop.permute.xlu0 %886
  %v889 = vadd.f32 %v879, %v887
  %v890 = vtanh.pop %v889
  %892 = vrot.lane.b32.xlu0 %v890, 64
  %v893 = vpop.permute.xlu0 %892
  %v895 = vmul.f32 %v878, %v893
  %897 = vrot.lane.b32.xlu0 %v895, 32
  %v898 = vpop.permute.xlu0 %897
  %v899 = vsel %vm803, %v898, 0
  %901 = vmatprep.subr.mxu0 0.0
  %902 = vmatpush1.msra.mxu0 0.0
  %903 = vmatprep.subr.mxu0 0.0
  %904 = vmatpush1.msra.mxu0 0.0
  %905 = vmatprep.subr.mxu0 0.0
  %906 = vmatpush1.msra.mxu0 0.0
  %907 = vmatprep.subr.mxu0 0.0
  %908 = vmatpush1.msra.mxu0 0.0
  %909 = vmatprep.subr.mxu0 0.0
  %910 = vmatpush1.msra.mxu0 0.0
  %911 = vmatprep.subr.mxu0 0.0
  %912 = vmatpush1.msra.mxu0 0.0
  %913 = vmatprep.subr.mxu0 0.0
  %914 = vmatpush1.msra.mxu0 0.0
  %915 = vmatprep.subr.mxu0 0.0
  %916 = vmatpush1.msra.mxu0 0.0
  %917 = vmatprep.subr.mxu0 0.0
  %918 = vmatpush1.msra.mxu0 0.0
  %919 = vmatprep.subr.mxu0 0.0
  %920 = vmatpush1.msra.mxu0 0.0
  %921 = vmatprep.subr.mxu0 0.0
  %922 = vmatpush1.msra.mxu0 0.0
  %923 = vmatprep.subr.mxu0 0.0
  %924 = vmatpush1.msra.mxu0 0.0
  %925 = vmatprep.subr.mxu0 0.0
  %926 = vmatpush1.msra.mxu0 %v596
  %927 = vmatprep.subr.mxu0 0.0
  %928 = vmatpush1.msra.mxu0 %v595
  %929 = vmatprep.subr.mxu0 0.0
  %930 = vmatpush1.msra.mxu0 %v594
  %931 = vmatprep.subr.mxu0 0.0
  %932 = vmatpush1.msra.mxu0 %v593
  %933 = vmatprep.subr.mxu0 0.0
  %934 = vmatpush2.msra.mxu0 0.0
  %935 = vmatprep.subr.mxu0 0.0
  %936 = vmatpush2.msra.mxu0 0.0
  %937 = vmatprep.subr.mxu0 0.0
  %938 = vmatpush2.msra.mxu0 0.0
  %939 = vmatprep.subr.mxu0 0.0
  %940 = vmatpush2.msra.mxu0 0.0
  %941 = vmatprep.subr.mxu0 0.0
  %942 = vmatpush2.msra.mxu0 0.0
  %943 = vmatprep.subr.mxu0 0.0
  %944 = vmatpush2.msra.mxu0 0.0
  %945 = vmatprep.subr.mxu0 0.0
  %946 = vmatpush2.msra.mxu0 0.0
  %947 = vmatprep.subr.mxu0 0.0
  %948 = vmatpush2.msra.mxu0 0.0
  %949 = vmatprep.subr.mxu0 0.0
  %950 = vmatpush2.msra.mxu0 0.0
  %951 = vmatprep.subr.mxu0 0.0
  %952 = vmatpush2.msra.mxu0 0.0
  %953 = vmatprep.subr.mxu0 0.0
  %954 = vmatpush2.msra.mxu0 0.0
  %955 = vmatprep.subr.mxu0 0.0
  %956 = vmatpush2.msra.mxu0 0.0
  %957 = vmatprep.subr.mxu0 0.0
  %958 = vmatpush2.msra.mxu0 0.0
  %959 = vmatprep.subr.mxu0 0.0
  %960 = vmatpush2.msra.mxu0 0.0
  %961 = vmatprep.subr.mxu0 0.0
  %962 = vmatpush2.msra.mxu0 0.0
  %963 = vmatprep.subr.mxu0 0.0
  %964 = vmatpush2.msra.mxu0 0.0
  %965 = vmatprep.mubr.f32.mxu0 0.0
  %966 = vmatmul.mubr.f32.gmra.mxu0 %v899
  %v967 = vpop.f32.mrf.mxu0
  %v968 = vadd.f32 %v798, %v967
  %v969 = vpop.f32.mrf.mxu0
  %970 = vdwg.mxu0
  %v971 = vtanh.pop %v968
  %v972 = vmul.f32 %v971, %v606
  %v973 = vadd.f32 %v972, %v607
  %v974 = vmul.f32 %v973, %v889
  %976 = vrot.lane.b32.xlu0 %v973, 64
  %v977 = vpop.permute.xlu0 %976
  %v979 = vmul.f32 %v973, %v977
  %981 = vrot.lane.b32.xlu0 %v979, 32
  %v982 = vpop.permute.xlu0 %981
  %v984 = vadd.f32 %v974, %v982
  %v985 = vtanh.pop %v984
  %987 = vrot.lane.b32.xlu0 %v985, 64
  %v988 = vpop.permute.xlu0 %987
  %v990 = vmul.f32 %v973, %v988
  %992 = vrot.lane.b32.xlu0 %v990, 32
  %v993 = vpop.permute.xlu0 %992
  %v994 = vsel %vm803, %v993, 0
  %996 = vmatprep.subr.mxu0 0.0
  %997 = vmatpush1.msra.mxu0 0.0
  %998 = vmatprep.subr.mxu0 0.0
  %999 = vmatpush1.msra.mxu0 0.0
  %1000 = vmatprep.subr.mxu0 0.0
  %1001 = vmatpush1.msra.mxu0 0.0
  %1002 = vmatprep.subr.mxu0 0.0
  %1003 = vmatpush1.msra.mxu0 0.0
  %1004 = vmatprep.subr.mxu0 0.0
  %1005 = vmatpush1.msra.mxu0 0.0
  %1006 = vmatprep.subr.mxu0 0.0
  %1007 = vmatpush1.msra.mxu0 0.0
  %1008 = vmatprep.subr.mxu0 0.0
  %1009 = vmatpush1.msra.mxu0 0.0
  %1010 = vmatprep.subr.mxu0 0.0
  %1011 = vmatpush1.msra.mxu0 0.0
  %1012 = vmatprep.subr.mxu0 0.0
  %1013 = vmatpush1.msra.mxu0 0.0
  %1014 = vmatprep.subr.mxu0 0.0
  %1015 = vmatpush1.msra.mxu0 0.0
  %1016 = vmatprep.subr.mxu0 0.0
  %1017 = vmatpush1.msra.mxu0 0.0
  %1018 = vmatprep.subr.mxu0 0.0
  %1019 = vmatpush1.msra.mxu0 0.0
  %1020 = vmatprep.subr.mxu0 0.0
  %1021 = vmatpush1.msra.mxu0 %v591
  %1022 = vmatprep.subr.mxu0 0.0
  %1023 = vmatpush1.msra.mxu0 %v590
  %1024 = vmatprep.subr.mxu0 0.0
  %1025 = vmatpush1.msra.mxu0 %v589
  %1026 = vmatprep.subr.mxu0 0.0
  %1027 = vmatpush1.msra.mxu0 %v588
  %1028 = vmatprep.subr.mxu0 0.0
  %1029 = vmatpush2.msra.mxu0 0.0
  %1030 = vmatprep.subr.mxu0 0.0
  %1031 = vmatpush2.msra.mxu0 0.0
  %1032 = vmatprep.subr.mxu0 0.0
  %1033 = vmatpush2.msra.mxu0 0.0
  %1034 = vmatprep.subr.mxu0 0.0
  %1035 = vmatpush2.msra.mxu0 0.0
  %1036 = vmatprep.subr.mxu0 0.0
  %1037 = vmatpush2.msra.mxu0 0.0
  %1038 = vmatprep.subr.mxu0 0.0
  %1039 = vmatpush2.msra.mxu0 0.0
  %1040 = vmatprep.subr.mxu0 0.0
  %1041 = vmatpush2.msra.mxu0 0.0
  %1042 = vmatprep.subr.mxu0 0.0
  %1043 = vmatpush2.msra.mxu0 0.0
  %1044 = vmatprep.subr.mxu0 0.0
  %1045 = vmatpush2.msra.mxu0 0.0
  %1046 = vmatprep.subr.mxu0 0.0
  %1047 = vmatpush2.msra.mxu0 0.0
  %1048 = vmatprep.subr.mxu0 0.0
  %1049 = vmatpush2.msra.mxu0 0.0
  %1050 = vmatprep.subr.mxu0 0.0
  %1051 = vmatpush2.msra.mxu0 0.0
  %1052 = vmatprep.subr.mxu0 0.0
  %1053 = vmatpush2.msra.mxu0 0.0
  %1054 = vmatprep.subr.mxu0 0.0
  %1055 = vmatpush2.msra.mxu0 0.0
  %1056 = vmatprep.subr.mxu0 0.0
  %1057 = vmatpush2.msra.mxu0 0.0
  %1058 = vmatprep.subr.mxu0 0.0
  %1059 = vmatpush2.msra.mxu0 0.0
  %1060 = vmatprep.mubr.f32.mxu0 0.0
  %1061 = vmatmul.mubr.f32.gmra.mxu0 %v994
  %v1062 = vpop.f32.mrf.mxu0
  %v1063 = vadd.f32 0.0, %v1062
  %v1064 = vpop.f32.mrf.mxu0
  %1065 = vdwg.mxu0
  %v1067 = vrot.slane %v1063, 4
  %v1069 = vadd.f32 %v687, %v1067
  %v1070 = vadd.f32 %v1069, %v699
  %v1071 = vtanh.pop %v1070
  %v1072 = vmul.f32 %v1071, %v606
  %v1073 = vadd.f32 %v1072, %v607
  %v1075 = vrot.slane %v984, 4
  %v1077 = vmul.f32 %v1073, %v1075
  %1079 = vrot.lane.b32.xlu0 %v1073, 64
  %v1080 = vpop.permute.xlu0 %1079
  %v1082 = vmul.f32 %v1073, %v1080
  %1084 = vrot.lane.b32.xlu0 %v1082, 32
  %v1085 = vpop.permute.xlu0 %1084
  %v1087 = vadd.f32 %v1077, %v1085
  %v1088 = vtanh.pop %v1087
  %1090 = vrot.lane.b32.xlu0 %v1088, 64
  %v1091 = vpop.permute.xlu0 %1090
  %v1093 = vmul.f32 %v1073, %v1091
  %v1095 = vrot.slane %v1093, 4
  %1096 = vrot.lane.b32.xlu0 %v1095, 32
  %v1097 = vpop.permute.xlu0 %1096
  %v1098 = vsel %vm803, %v1097, 0
  %1100 = vmatprep.subr.mxu0 0.0
  %1101 = vmatpush1.msra.mxu0 0.0
  %1102 = vmatprep.subr.mxu0 0.0
  %1103 = vmatpush1.msra.mxu0 0.0
  %1104 = vmatprep.subr.mxu0 0.0
  %1105 = vmatpush1.msra.mxu0 0.0
  %1106 = vmatprep.subr.mxu0 0.0
  %1107 = vmatpush1.msra.mxu0 0.0
  %1108 = vmatprep.subr.mxu0 0.0
  %1109 = vmatpush1.msra.mxu0 0.0
  %1110 = vmatprep.subr.mxu0 0.0
  %1111 = vmatpush1.msra.mxu0 0.0
  %1112 = vmatprep.subr.mxu0 0.0
  %1113 = vmatpush1.msra.mxu0 0.0
  %1114 = vmatprep.subr.mxu0 0.0
  %1115 = vmatpush1.msra.mxu0 0.0
  %1116 = vmatprep.subr.mxu0 0.0
  %1117 = vmatpush1.msra.mxu0 0.0
  %1118 = vmatprep.subr.mxu0 0.0
  %1119 = vmatpush1.msra.mxu0 0.0
  %1120 = vmatprep.subr.mxu0 0.0
  %1121 = vmatpush1.msra.mxu0 0.0
  %1122 = vmatprep.subr.mxu0 0.0
  %1123 = vmatpush1.msra.mxu0 0.0
  %1124 = vmatprep.subr.mxu0 0.0
  %1125 = vmatpush1.msra.mxu0 %v591
  %1126 = vmatprep.subr.mxu0 0.0
  %1127 = vmatpush1.msra.mxu0 %v590
  %1128 = vmatprep.subr.mxu0 0.0
  %1129 = vmatpush1.msra.mxu0 %v589
  %1130 = vmatprep.subr.mxu0 0.0
  %1131 = vmatpush1.msra.mxu0 %v588
  %1132 = vmatprep.subr.mxu0 0.0
  %1133 = vmatpush2.msra.mxu0 0.0
  %1134 = vmatprep.subr.mxu0 0.0
  %1135 = vmatpush2.msra.mxu0 0.0
  %1136 = vmatprep.subr.mxu0 0.0
  %1137 = vmatpush2.msra.mxu0 0.0
  %1138 = vmatprep.subr.mxu0 0.0
  %1139 = vmatpush2.msra.mxu0 0.0
  %1140 = vmatprep.subr.mxu0 0.0
  %1141 = vmatpush2.msra.mxu0 0.0
  %1142 = vmatprep.subr.mxu0 0.0
  %1143 = vmatpush2.msra.mxu0 0.0
  %1144 = vmatprep.subr.mxu0 0.0
  %1145 = vmatpush2.msra.mxu0 0.0
  %1146 = vmatprep.subr.mxu0 0.0
  %1147 = vmatpush2.msra.mxu0 0.0
  %1148 = vmatprep.subr.mxu0 0.0
  %1149 = vmatpush2.msra.mxu0 0.0
  %1150 = vmatprep.subr.mxu0 0.0
  %1151 = vmatpush2.msra.mxu0 0.0
  %1152 = vmatprep.subr.mxu0 0.0
  %1153 = vmatpush2.msra.mxu0 0.0
  %1154 = vmatprep.subr.mxu0 0.0
  %1155 = vmatpush2.msra.mxu0 0.0
  %1156 = vmatprep.subr.mxu0 0.0
  %1157 = vmatpush2.msra.mxu0 0.0
  %1158 = vmatprep.subr.mxu0 0.0
  %1159 = vmatpush2.msra.mxu0 0.0
  %1160 = vmatprep.subr.mxu0 0.0
  %1161 = vmatpush2.msra.mxu0 0.0
  %1162 = vmatprep.subr.mxu0 0.0
  %1163 = vmatpush2.msra.mxu0 0.0
  %1164 = vmatprep.mubr.f32.mxu0 0.0
  %1165 = vmatmul.mubr.f32.gmra.mxu0 %v1098
  %v1166 = vpop.f32.mrf.mxu0
  %v1167 = vadd.f32 0.0, %v1166
  %v1168 = vpop.f32.mrf.mxu0
  %1169 = vdwg.mxu0
  %v1171 = vrot.slane %v1167, 2
  %v1173 = vadd.f32 %v687, %v1171
  %v1174 = vadd.f32 %v1173, %v699
  %v1175 = vtanh.pop %v1174
  %v1176 = vmul.f32 %v1175, %v606
  %v1177 = vadd.f32 %v1176, %v607
  %v1179 = vrot.slane %v1087, 6
  %v1181 = vmul.f32 %v1177, %v1179
  %1183 = vrot.lane.b32.xlu0 %v1177, 64
  %v1184 = vpop.permute.xlu0 %1183
  %v1186 = vmul.f32 %v1177, %v1184
  %1188 = vrot.lane.b32.xlu0 %v1186, 32
  %v1189 = vpop.permute.xlu0 %1188
  %v1191 = vadd.f32 %v1181, %v1189
  %v1192 = vtanh.pop %v1191
  %1194 = vrot.lane.b32.xlu0 %v1192, 64
  %v1195 = vpop.permute.xlu0 %1194
  %v1197 = vmul.f32 %v1177, %v1195
  %v1199 = vrot.slane %v1197, 6
  %1200 = vrot.lane.b32.xlu0 %v1199, 32
  %v1201 = vpop.permute.xlu0 %1200
  %v1202 = vsel %vm803, %v1201, 0
  %1204 = vmatprep.subr.mxu0 0.0
  %1205 = vmatpush1.msra.mxu0 0.0
  %1206 = vmatprep.subr.mxu0 0.0
  %1207 = vmatpush1.msra.mxu0 0.0
  %1208 = vmatprep.subr.mxu0 0.0
  %1209 = vmatpush1.msra.mxu0 0.0
  %1210 = vmatprep.subr.mxu0 0.0
  %1211 = vmatpush1.msra.mxu0 0.0
  %1212 = vmatprep.subr.mxu0 0.0
  %1213 = vmatpush1.msra.mxu0 0.0
  %1214 = vmatprep.subr.mxu0 0.0
  %1215 = vmatpush1.msra.mxu0 0.0
  %1216 = vmatprep.subr.mxu0 0.0
  %1217 = vmatpush1.msra.mxu0 0.0
  %1218 = vmatprep.subr.mxu0 0.0
  %1219 = vmatpush1.msra.mxu0 0.0
  %1220 = vmatprep.subr.mxu0 0.0
  %1221 = vmatpush1.msra.mxu0 0.0
  %1222 = vmatprep.subr.mxu0 0.0
  %1223 = vmatpush1.msra.mxu0 0.0
  %1224 = vmatprep.subr.mxu0 0.0
  %1225 = vmatpush1.msra.mxu0 0.0
  %1226 = vmatprep.subr.mxu0 0.0
  %1227 = vmatpush1.msra.mxu0 0.0
  %1228 = vmatprep.subr.mxu0 0.0
  %1229 = vmatpush1.msra.mxu0 %v596
  %1230 = vmatprep.subr.mxu0 0.0
  %1231 = vmatpush1.msra.mxu0 %v595
  %1232 = vmatprep.subr.mxu0 0.0
  %1233 = vmatpush1.msra.mxu0 %v594
  %1234 = vmatprep.subr.mxu0 0.0
  %1235 = vmatpush1.msra.mxu0 %v593
  %1236 = vmatprep.subr.mxu0 0.0
  %1237 = vmatpush2.msra.mxu0 0.0
  %1238 = vmatprep.subr.mxu0 0.0
  %1239 = vmatpush2.msra.mxu0 0.0
  %1240 = vmatprep.subr.mxu0 0.0
  %1241 = vmatpush2.msra.mxu0 0.0
  %1242 = vmatprep.subr.mxu0 0.0
  %1243 = vmatpush2.msra.mxu0 0.0
  %1244 = vmatprep.subr.mxu0 0.0
  %1245 = vmatpush2.msra.mxu0 0.0
  %1246 = vmatprep.subr.mxu0 0.0
  %1247 = vmatpush2.msra.mxu0 0.0
  %1248 = vmatprep.subr.mxu0 0.0
  %1249 = vmatpush2.msra.mxu0 0.0
  %1250 = vmatprep.subr.mxu0 0.0
  %1251 = vmatpush2.msra.mxu0 0.0
  %1252 = vmatprep.subr.mxu0 0.0
  %1253 = vmatpush2.msra.mxu0 0.0
  %1254 = vmatprep.subr.mxu0 0.0
  %1255 = vmatpush2.msra.mxu0 0.0
  %1256 = vmatprep.subr.mxu0 0.0
  %1257 = vmatpush2.msra.mxu0 0.0
  %1258 = vmatprep.subr.mxu0 0.0
  %1259 = vmatpush2.msra.mxu0 0.0
  %1260 = vmatprep.subr.mxu0 0.0
  %1261 = vmatpush2.msra.mxu0 0.0
  %1262 = vmatprep.subr.mxu0 0.0
  %1263 = vmatpush2.msra.mxu0 0.0
  %1264 = vmatprep.subr.mxu0 0.0
  %1265 = vmatpush2.msra.mxu0 0.0
  %1266 = vmatprep.subr.mxu0 0.0
  %1267 = vmatpush2.msra.mxu0 0.0
  %1268 = vmatprep.mubr.f32.mxu0 0.0
  %1269 = vmatmul.mubr.f32.gmra.mxu0 %v1202
  %v1270 = vpop.f32.mrf.mxu0
  %v1271 = vadd.f32 %v798, %v1270
  %v1272 = vpop.f32.mrf.mxu0
  %1273 = vdwg.mxu0
  %v1274 = vtanh.pop %v1271
  %v1275 = vmul.f32 %v1274, %v606
  %v1276 = vadd.f32 %v1275, %v607
  %v1278 = vrot.slane %v1191, 6
  %v1280 = vmul.f32 %v1276, %v1278
  %1282 = vrot.lane.b32.xlu0 %v1276, 64
  %v1283 = vpop.permute.xlu0 %1282
  %v1285 = vmul.f32 %v1276, %v1283
  %1287 = vrot.lane.b32.xlu0 %v1285, 32
  %v1288 = vpop.permute.xlu0 %1287
  %v1290 = vadd.f32 %v1280, %v1288
  %v1291 = vtanh.pop %v1290
  %1293 = vrot.lane.b32.xlu0 %v1291, 64
  %v1294 = vpop.permute.xlu0 %1293
  %v1296 = vmul.f32 %v1276, %v1294
  %1298 = vrot.lane.b32.xlu0 %v1296, 32
  %v1299 = vpop.permute.xlu0 %1298
  %v1300 = vsel %vm803, %v1299, 0
  %1302 = vmatprep.subr.mxu0 0.0
  %1303 = vmatpush1.msra.mxu0 0.0
  %1304 = vmatprep.subr.mxu0 0.0
  %1305 = vmatpush1.msra.mxu0 0.0
  %1306 = vmatprep.subr.mxu0 0.0
  %1307 = vmatpush1.msra.mxu0 0.0
  %1308 = vmatprep.subr.mxu0 0.0
  %1309 = vmatpush1.msra.mxu0 0.0
  %1310 = vmatprep.subr.mxu0 0.0
  %1311 = vmatpush1.msra.mxu0 0.0
  %1312 = vmatprep.subr.mxu0 0.0
  %1313 = vmatpush1.msra.mxu0 0.0
  %1314 = vmatprep.subr.mxu0 0.0
  %1315 = vmatpush1.msra.mxu0 0.0
  %1316 = vmatprep.subr.mxu0 0.0
  %1317 = vmatpush1.msra.mxu0 0.0
  %1318 = vmatprep.subr.mxu0 0.0
  %1319 = vmatpush1.msra.mxu0 0.0
  %1320 = vmatprep.subr.mxu0 0.0
  %1321 = vmatpush1.msra.mxu0 0.0
  %1322 = vmatprep.subr.mxu0 0.0
  %1323 = vmatpush1.msra.mxu0 0.0
  %1324 = vmatprep.subr.mxu0 0.0
  %1325 = vmatpush1.msra.mxu0 0.0
  %1326 = vmatprep.subr.mxu0 0.0
  %1327 = vmatpush1.msra.mxu0 %v591
  %1328 = vmatprep.subr.mxu0 0.0
  %1329 = vmatpush1.msra.mxu0 %v590
  %1330 = vmatprep.subr.mxu0 0.0
  %1331 = vmatpush1.msra.mxu0 %v589
  %1332 = vmatprep.subr.mxu0 0.0
  %1333 = vmatpush1.msra.mxu0 %v588
  %1334 = vmatprep.subr.mxu0 0.0
  %1335 = vmatpush2.msra.mxu0 0.0
  %1336 = vmatprep.subr.mxu0 0.0
  %1337 = vmatpush2.msra.mxu0 0.0
  %1338 = vmatprep.subr.mxu0 0.0
  %1339 = vmatpush2.msra.mxu0 0.0
  %1340 = vmatprep.subr.mxu0 0.0
  %1341 = vmatpush2.msra.mxu0 0.0
  %1342 = vmatprep.subr.mxu0 0.0
  %1343 = vmatpush2.msra.mxu0 0.0
  %1344 = vmatprep.subr.mxu0 0.0
  %1345 = vmatpush2.msra.mxu0 0.0
  %1346 = vmatprep.subr.mxu0 0.0
  %1347 = vmatpush2.msra.mxu0 0.0
  %1348 = vmatprep.subr.mxu0 0.0
  %1349 = vmatpush2.msra.mxu0 0.0
  %1350 = vmatprep.subr.mxu0 0.0
  %1351 = vmatpush2.msra.mxu0 0.0
  %1352 = vmatprep.subr.mxu0 0.0
  %1353 = vmatpush2.msra.mxu0 0.0
  %1354 = vmatprep.subr.mxu0 0.0
  %1355 = vmatpush2.msra.mxu0 0.0
  %1356 = vmatprep.subr.mxu0 0.0
  %1357 = vmatpush2.msra.mxu0 0.0
  %1358 = vmatprep.subr.mxu0 0.0
  %1359 = vmatpush2.msra.mxu0 0.0
  %1360 = vmatprep.subr.mxu0 0.0
  %1361 = vmatpush2.msra.mxu0 0.0
  %1362 = vmatprep.subr.mxu0 0.0
  %1363 = vmatpush2.msra.mxu0 0.0
  %1364 = vmatprep.subr.mxu0 0.0
  %1365 = vmatpush2.msra.mxu0 0.0
  %1366 = vmatprep.mubr.f32.mxu0 0.0
  %1367 = vmatmul.mubr.f32.gmra.mxu0 %v1300
  %v1368 = vpop.f32.mrf.mxu0
  %v1369 = vadd.f32 0.0, %v1368
  %v1370 = vpop.f32.mrf.mxu0
  %1371 = vdwg.mxu0
  %v1373 = vrot.slane %v1369, 6
  %v1375 = vadd.f32 %v692, %v1373
  %v1376 = vadd.f32 %v1375, %v699
  %v1377 = vtanh.pop %v1376
  %v1378 = vmul.f32 %v1377, %v606
  %v1379 = vadd.f32 %v1378, %v607
  %v1381 = vrot.slane %v1290, 6
  %v1383 = vmul.f32 %v1379, %v1381
  %1385 = vrot.lane.b32.xlu0 %v1379, 64
  %v1386 = vpop.permute.xlu0 %1385
  %v1388 = vmul.f32 %v1379, %v1386
  %1390 = vrot.lane.b32.xlu0 %v1388, 32
  %v1391 = vpop.permute.xlu0 %1390
  %v1393 = vadd.f32 %v1383, %v1391
  %v1394 = vtanh.pop %v1393
  %1396 = vrot.lane.b32.xlu0 %v1394, 64
  %v1397 = vpop.permute.xlu0 %1396
  %v1399 = vmul.f32 %v1379, %v1397
  %v1401 = vrot.slane %v1399, 2
  %1402 = vrot.lane.b32.xlu0 %v1401, 32
  %v1403 = vpop.permute.xlu0 %1402
  %v1404 = vsel %vm803, %v1403, 0
  %1406 = vmatprep.subr.mxu0 0.0
  %1407 = vmatpush1.msra.mxu0 0.0
  %1408 = vmatprep.subr.mxu0 0.0
  %1409 = vmatpush1.msra.mxu0 0.0
  %1410 = vmatprep.subr.mxu0 0.0
  %1411 = vmatpush1.msra.mxu0 0.0
  %1412 = vmatprep.subr.mxu0 0.0
  %1413 = vmatpush1.msra.mxu0 0.0
  %1414 = vmatprep.subr.mxu0 0.0
  %1415 = vmatpush1.msra.mxu0 0.0
  %1416 = vmatprep.subr.mxu0 0.0
  %1417 = vmatpush1.msra.mxu0 0.0
  %1418 = vmatprep.subr.mxu0 0.0
  %1419 = vmatpush1.msra.mxu0 0.0
  %1420 = vmatprep.subr.mxu0 0.0
  %1421 = vmatpush1.msra.mxu0 0.0
  %1422 = vmatprep.subr.mxu0 0.0
  %1423 = vmatpush1.msra.mxu0 0.0
  %1424 = vmatprep.subr.mxu0 0.0
  %1425 = vmatpush1.msra.mxu0 0.0
  %1426 = vmatprep.subr.mxu0 0.0
  %1427 = vmatpush1.msra.mxu0 0.0
  %1428 = vmatprep.subr.mxu0 0.0
  %1429 = vmatpush1.msra.mxu0 0.0
  %1430 = vmatprep.subr.mxu0 0.0
  %1431 = vmatpush1.msra.mxu0 %v596
  %1432 = vmatprep.subr.mxu0 0.0
  %1433 = vmatpush1.msra.mxu0 %v595
  %1434 = vmatprep.subr.mxu0 0.0
  %1435 = vmatpush1.msra.mxu0 %v594
  %1436 = vmatprep.subr.mxu0 0.0
  %1437 = vmatpush1.msra.mxu0 %v593
  %1438 = vmatprep.subr.mxu0 0.0
  %1439 = vmatpush2.msra.mxu0 0.0
  %1440 = vmatprep.subr.mxu0 0.0
  %1441 = vmatpush2.msra.mxu0 0.0
  %1442 = vmatprep.subr.mxu0 0.0
  %1443 = vmatpush2.msra.mxu0 0.0
  %1444 = vmatprep.subr.mxu0 0.0
  %1445 = vmatpush2.msra.mxu0 0.0
  %1446 = vmatprep.subr.mxu0 0.0
  %1447 = vmatpush2.msra.mxu0 0.0
  %1448 = vmatprep.subr.mxu0 0.0
  %1449 = vmatpush2.msra.mxu0 0.0
  %1450 = vmatprep.subr.mxu0 0.0
  %1451 = vmatpush2.msra.mxu0 0.0
  %1452 = vmatprep.subr.mxu0 0.0
  %1453 = vmatpush2.msra.mxu0 0.0
  %1454 = vmatprep.subr.mxu0 0.0
  %1455 = vmatpush2.msra.mxu0 0.0
  %1456 = vmatprep.subr.mxu0 0.0
  %1457 = vmatpush2.msra.mxu0 0.0
  %1458 = vmatprep.subr.mxu0 0.0
  %1459 = vmatpush2.msra.mxu0 0.0
  %1460 = vmatprep.subr.mxu0 0.0
  %1461 = vmatpush2.msra.mxu0 0.0
  %1462 = vmatprep.subr.mxu0 0.0
  %1463 = vmatpush2.msra.mxu0 0.0
  %1464 = vmatprep.subr.mxu0 0.0
  %1465 = vmatpush2.msra.mxu0 0.0
  %1466 = vmatprep.subr.mxu0 0.0
  %1467 = vmatpush2.msra.mxu0 0.0
  %1468 = vmatprep.subr.mxu0 0.0
  %1469 = vmatpush2.msra.mxu0 0.0
  %1470 = vmatprep.mubr.f32.mxu0 0.0
  %1471 = vmatmul.mubr.f32.gmra.mxu0 %v1404
  %v1472 = vpop.f32.mrf.mxu0
  %v1473 = vadd.f32 %v798, %v1472
  %v1474 = vpop.f32.mrf.mxu0
  %1475 = vdwg.mxu0
  %v1476 = vtanh.pop %v1473
  %v1477 = vmul.f32 %v1476, %v606
  %v1478 = vadd.f32 %v1477, %v607
  %v1480 = vrot.slane %v1393, 2
  %v1482 = vmul.f32 %v1478, %v1480
  %1484 = vrot.lane.b32.xlu0 %v1478, 64
  %v1485 = vpop.permute.xlu0 %1484
  %v1487 = vmul.f32 %v1478, %v1485
  %1489 = vrot.lane.b32.xlu0 %v1487, 32
  %v1490 = vpop.permute.xlu0 %1489
  %v1492 = vadd.f32 %v1482, %v1490
  %v1493 = vtanh.pop %v1492
  %1495 = vrot.lane.b32.xlu0 %v1493, 64
  %v1496 = vpop.permute.xlu0 %1495
  %v1498 = vmul.f32 %v1478, %v1496
  %v1499 = vrot.slane %v895, 6
  %v1501 = vrot.slane %v990, 4
  %v1503 = vrot.slane %v1093, 6
  %v1506 = vrot.slane %v1296, 6
  %v1508 = vrot.slane %v1399, 6
  %v1511 = vrot.slane %v1498, 2
  %v1513 = vsel %vm366, %v793, %v1499
  %v1514 = vsel %vm75, %v1513, %v1501
  %vm1515 = vcmask 1045504
  %v1516 = vsel %vm1515, %v1514, %v1503
  %v1517 = vsel %vm366, %v1199, %v1506
  %v1518 = vsel %vm75, %v1517, %v1508
  %v1519 = vsel %vm1515, %v1518, %v1511
  %v1521 = vlaneseq
  %v1522 = vshrl.u32 %v1521, 7
  %v1523 = vsub.s32 0, %v1522
  %v1524 = vrot.slane %v602, %v1523
  %1528 = vrot.lane.b32.xlu0 %v1516, 32
  %v1529 = vpop.permute.xlu0 %1528
  %1530 = vrot.lane.b32.xlu0 %v1519, 32
  %v1531 = vpop.permute.xlu0 %1530
  %v1532 = vsel %vm803, %v1529, 0
  %v1534 = vsel %vm803, %v1531, 0
  %1536 = vmatprep.subr.mxu0 0.0
  %1537 = vmatpush1.msra.mxu0 0.0
  %1538 = vmatprep.subr.mxu0 0.0
  %1539 = vmatpush1.msra.mxu0 0.0
  %1540 = vmatprep.subr.mxu0 0.0
  %1541 = vmatpush1.msra.mxu0 0.0
  %1542 = vmatprep.subr.mxu0 0.0
  %1543 = vmatpush1.msra.mxu0 0.0
  %1544 = vmatprep.subr.mxu0 0.0
  %1545 = vmatpush1.msra.mxu0 0.0
  %1546 = vmatprep.subr.mxu0 0.0
  %1547 = vmatpush1.msra.mxu0 0.0
  %1548 = vmatprep.subr.mxu0 0.0
  %1549 = vmatpush1.msra.mxu0 0.0
  %1550 = vmatprep.subr.mxu0 0.0
  %1551 = vmatpush1.msra.mxu0 0.0
  %1552 = vmatprep.subr.mxu0 0.0
  %1553 = vmatpush1.msra.mxu0 0.0
  %1554 = vmatprep.subr.mxu0 0.0
  %1555 = vmatpush1.msra.mxu0 0.0
  %1556 = vmatprep.subr.mxu0 0.0
  %1557 = vmatpush1.msra.mxu0 0.0
  %1558 = vmatprep.subr.mxu0 0.0
  %1559 = vmatpush1.msra.mxu0 0.0
  %1560 = vmatprep.subr.mxu0 0.0
  %1561 = vmatpush1.msra.mxu0 %v601
  %1562 = vmatprep.subr.mxu0 0.0
  %1563 = vmatpush1.msra.mxu0 %v600
  %1564 = vmatprep.subr.mxu0 0.0
  %1565 = vmatpush1.msra.mxu0 %v599
  %1566 = vmatprep.subr.mxu0 0.0
  %1567 = vmatpush1.msra.mxu0 %v598
  %1568 = vmatprep.subr.mxu0 0.0
  %1569 = vmatpush2.msra.mxu0 0.0
  %1570 = vmatprep.subr.mxu0 0.0
  %1571 = vmatpush2.msra.mxu0 0.0
  %1572 = vmatprep.subr.mxu0 0.0
  %1573 = vmatpush2.msra.mxu0 0.0
  %1574 = vmatprep.subr.mxu0 0.0
  %1575 = vmatpush2.msra.mxu0 0.0
  %1576 = vmatprep.subr.mxu0 0.0
  %1577 = vmatpush2.msra.mxu0 0.0
  %1578 = vmatprep.subr.mxu0 0.0
  %1579 = vmatpush2.msra.mxu0 0.0
  %1580 = vmatprep.subr.mxu0 0.0
  %1581 = vmatpush2.msra.mxu0 0.0
  %1582 = vmatprep.subr.mxu0 0.0
  %1583 = vmatpush2.msra.mxu0 0.0
  %1584 = vmatprep.subr.mxu0 0.0
  %1585 = vmatpush2.msra.mxu0 0.0
  %1586 = vmatprep.subr.mxu0 0.0
  %1587 = vmatpush2.msra.mxu0 0.0
  %1588 = vmatprep.subr.mxu0 0.0
  %1589 = vmatpush2.msra.mxu0 0.0
  %1590 = vmatprep.subr.mxu0 0.0
  %1591 = vmatpush2.msra.mxu0 0.0
  %1592 = vmatprep.subr.mxu0 0.0
  %1593 = vmatpush2.msra.mxu0 0.0
  %1594 = vmatprep.subr.mxu0 0.0
  %1595 = vmatpush2.msra.mxu0 0.0
  %1596 = vmatprep.subr.mxu0 0.0
  %1597 = vmatpush2.msra.mxu0 0.0
  %1598 = vmatprep.subr.mxu0 0.0
  %1599 = vmatpush2.msra.mxu0 0.0
  %1600 = vmatprep.mubr.f32.mxu0 0.0
  %1601 = vmatmul.mubr.f32.gmra.mxu0 %v1532
  %v1602 = vpop.f32.mrf.mxu0
  %v1603 = vadd.f32 %v1524, %v1602
  %v1604 = vpop.f32.mrf.mxu0
  %1605 = vmatprep.mubr.f32.mxu0 0.0
  %1606 = vmatmul.mubr.f32.gmra.mxu0 %v1534
  %v1607 = vpop.f32.mrf.mxu0
  %v1608 = vadd.f32 %v1524, %v1607
  %v1609 = vpop.f32.mrf.mxu0
  %1610 = vdwg.mxu0
  %1611 = vst.msk [vmem:[%s13] sm:$0xff] %vm610, %v1603
  %1612 = vst.msk [vmem:[%s13 + $0x8] sm:$0xff] %vm610, %v1608
  // Predicated region
  $region54: #{_fused_forward.1} parent=0 // pred_check
    _
  $region55: #{_fused_forward.1} parent=0 // pred_check_branch
    %1614 = sbr.rel (0) target = $region57
  $region56: #{_fused_forward.1} parent=0 // pred_region
    _
  $region57: #{_fused_forward.1} parent=0 // pred_fallthru
    _
  // Predicated region
  $region58: #{_fused_forward.1} parent=0 // pred_check
    _
  $region59: #{_fused_forward.1} parent=0 // pred_check_branch
    %1616 = sbr.rel (0) target = $region61
  $region60: #{_fused_forward.1} parent=0 // pred_region
    _
  $region61: #{_fused_forward.1} parent=0 // pred_fallthru
    _

</llo_original>
